<compile_context>
chip_gen: v7x
topology: tpu7x:2x2x1
jax: 0.10.0
libtpu: 0.0.40
codegen_flags: <defaults>
</compile_context>

<pallas_src>
import numpy as np
import jax
import jax.numpy as jnp
from jax.experimental import pallas as pl
from jax.experimental.pallas import tpu as pltpu

# ----- model dimensions (small, consistent with the module's forward) -----
S = 8                     # sequence length fed to the MHA encoder
D = 16                    # d_model of the encoder
NUM_HEADS = 2
DK = D // NUM_HEADS       # per-head dim (8)
STATE_DIM = S * D         # 128  (x.reshape(B, -1) after the encoder)
ACTION_DIM = 8
H0, H1 = 64, 64           # hidden_size = (H0, H1)
LN_EPS = 1e-5             # PyTorch nn.LayerNorm default
LANES = 128

TB = 8                    # batch rows per grid step (fills the 8 sublanes)
TBS = TB * S              # 64 encoder rows per grid step

WEIGHTS_FINAL_INIT = 0.003
BIAS_FINAL_INIT = 0.0003

# ----- packed `mats` slab layout (rows x 128 lanes, fp32) -------------------
# rows 0:16,  lanes 0:64   : W_enc = [Wq0*s | Wk0 | Wq1*s | Wk1 | Wvo0 | Wvo1]
# rows 16:144,lanes 0:64   : W1  (flatten folded into the row index)
# rows 16:88, lanes 64:128 : W2  (rows 0:64 = h1 part, rows 64:72 = action part)
R_WENC = 0
R_WH = R_WENC + D
MAT_ROWS = R_WH + STATE_DIM          # 144 rows  (~72 KB)

# ----- `vecs` slab rows (biases / LN params, zero-padded to 128 lanes) ------
V_BPROJ, V_BO, V_GENC, V_BENC = 0, 1, 2, 3
V_B1, V_G1, V_BE1 = 4, 5, 6
V_B2, V_G2, V_BE2 = 7, 8, 9
V_WV, V_BV = 10, 11
VEC_ROWS = 16


def _ln(x, gamma, beta):
    """LayerNorm over the last axis (biased variance, like nn.LayerNorm)."""
    mu = jnp.mean(x, axis=-1, keepdims=True)
    var = jnp.mean((x - mu) ** 2, axis=-1, keepdims=True)
    return (x - mu) * jax.lax.rsqrt(var + LN_EPS) * gamma + beta


def critic_kernel(x_ref, a_ref, mats_ref, vecs_ref, out_ref):
    x = x_ref[...]                                      # (TBS, D), row = s*TB + b
    acts = a_ref[...]                                   # (TB, ACTION_DIM)

    # ---------------- MHA encoder (single fused projection) ----------------
    # proj lanes: [q0 | k0 | q1 | k1 | vo0 | vo1]; Q pre-scaled by 1/sqrt(dk),
    # vo_h = x @ (Wv_h @ Wo_h) (output projection folded host-side).
    w_enc = mats_ref[R_WENC:R_WENC + D, 0:4 * DK + 2 * D]            # (16, 64)
    proj = jnp.dot(x, w_enc, preferred_element_type=jnp.float32)
    proj = proj + vecs_ref[V_BPROJ:V_BPROJ + 1, 0:4 * DK + 2 * D]

    # Block-diagonal additive mask: rows/cols only attend within the same
    # local batch element (row % TB).  Constant per compile; built from iota.
    ri = jax.lax.broadcasted_iota(jnp.int32, (TBS, TBS), 0)
    ci = jax.lax.broadcasted_iota(jnp.int32, (TBS, TBS), 1)
    neg = jnp.where((ri & (TB - 1)) == (ci & (TB - 1)), 0.0, -1e30)

    attn = vecs_ref[V_BO:V_BO + 1, 0:D]                 # folded bo + sum_h bv_h@Wo_h
    for h in range(NUM_HEADS):                          # static, 2 iterations
        q = proj[:, 2 * DK * h:2 * DK * h + DK]         # (TBS, DK)
        k = proj[:, 2 * DK * h + DK:2 * DK * (h + 1)]   # (TBS, DK)
        vo = proj[:, 2 * D + D * h:2 * D + D * (h + 1)]  # (TBS, D) == v_h @ Wo_h
        s = jnp.einsum('qd,kd->qk', q, k,
                       preferred_element_type=jnp.float32) + neg     # (TBS, TBS)
        s = s - jnp.max(s, axis=-1, keepdims=True)      # kept for robustness
        e = jnp.exp(s)
        p = e * pl.reciprocal(jnp.sum(e, axis=-1, keepdims=True), approx=True)
        attn = attn + jnp.dot(p, vo, preferred_element_type=jnp.float32)

    enc = _ln(x + attn,
              vecs_ref[V_GENC:V_GENC + 1, 0:D],
              vecs_ref[V_BENC:V_BENC + 1, 0:D])         # (TBS, D)

    # ---------------- x.reshape(B, -1): flatten as a value ----------------
    # s-major row layout => rows for position s are the contiguous sublane
    # block enc[s*TB:(s+1)*TB]; lane-concat gives flat[b, s*D + d].
    flat = jnp.concatenate(
        [enc[s * TB:(s + 1) * TB, :] for s in range(S)], axis=-1)    # (TB, 128)

    # ---------------- linear1 -> LN -> ReLU --------------------------------
    w1 = mats_ref[R_WH:R_WH + STATE_DIM, 0:H0]                       # (128, 64)
    h1 = (jnp.dot(flat, w1, preferred_element_type=jnp.float32)
          + vecs_ref[V_B1:V_B1 + 1, 0:H0])
    h1 = jnp.maximum(_ln(h1,
                         vecs_ref[V_G1:V_G1 + 1, 0:H0],
                         vecs_ref[V_BE1:V_BE1 + 1, 0:H0]), 0.0)

    # ---------------- concat(h1, actions) -> linear2 -> LN -> ReLU ---------
    # One fused matmul; W2 lives in lanes 64:128 of the W1 rows, so we matmul
    # against the full-width row block and keep the upper half of the result
    # (lanes 0:64 are harmless garbage).
    cat = jnp.concatenate([h1, acts], axis=-1)                        # (TB, 72)
    w2rows = mats_ref[R_WH:R_WH + H0 + ACTION_DIM, :]                 # (72, 128)
    h2 = jnp.dot(cat, w2rows, preferred_element_type=jnp.float32)[:, LANES - H1:]
    h2 = h2 + vecs_ref[V_B2:V_B2 + 1, 0:H1]
    h2 = jnp.maximum(_ln(h2,
                         vecs_ref[V_G2:V_G2 + 1, 0:H1],
                         vecs_ref[V_BE2:V_BE2 + 1, 0:H1]), 0.0)

    # ---------------- V head: VPU multiply + lane reduce -------------------
    wv = vecs_ref[V_WV:V_WV + 1, 0:H1]                                # (1, 64)
    v = jnp.sum(h2 * wv, axis=-1, keepdims=True) + vecs_ref[V_BV:V_BV + 1, 0:1]
    out_ref[...] = jnp.broadcast_to(v, (TB, LANES))     # lane-dense store


@jax.jit
def critic_forward(x, actions, mats, vecs):
    """x: (B, S, D) fp32, actions: (B, ACTION_DIM) fp32 -> (B, 1) fp32."""
    b = x.shape[0]
    nt = -(-b // TB)                 # grid tiles over the batch
    b_pad = nt * TB
    xp = jnp.pad(x.astype(jnp.float32), ((0, b_pad - b), (0, 0), (0, 0)))
    ap = jnp.pad(actions.astype(jnp.float32), ((0, b_pad - b), (0, 0)))
    # tile-major, then s-major-within-tile row layout: row = (tile, s, b_local)
    x2d = jnp.transpose(xp.reshape(nt, TB, S, D), (0, 2, 1, 3)).reshape(nt * S * TB, D)

    out = pl.pallas_call(
        critic_kernel,
        out_shape=jax.ShapeDtypeStruct((b_pad, LANES), jnp.float32),
        grid=(nt,),
        in_specs=[
            pl.BlockSpec((S * TB, D), lambda i: (i, 0)),
            pl.BlockSpec((TB, ACTION_DIM), lambda i: (i, 0)),
            pl.BlockSpec((MAT_ROWS, LANES), lambda i: (0, 0)),   # VMEM-resident
            pl.BlockSpec((VEC_ROWS, LANES), lambda i: (0, 0)),   # VMEM-resident
        ],
        out_specs=pl.BlockSpec((TB, LANES), lambda i: (i, 0)),
        compiler_params=pltpu.CompilerParams(dimension_semantics=("parallel",)),
    )(x2d, ap, mats, vecs)
    return out[:b, 0:1]              # only lane 0 of the padded V head is real


def make_params(key):
    """Deterministic parameter init mirroring the module's __init__."""
    def u(k, shape, bound):
        return jax.random.uniform(k, shape, jnp.float32, -bound, bound)

    ks = jax.random.split(key, 16)
    inv = lambda n: 1.0 / float(np.sqrt(n))

    return dict(
        # assumed MHA encoder params (nn.Linear-style fan-in uniform)
        wq=u(ks[0], (D, D), inv(D)), bq=u(ks[1], (D,), inv(D)),
        wk=u(ks[2], (D, D), inv(D)), bk=u(ks[3], (D,), inv(D)),
        wv=u(ks[4], (D, D), inv(D)), bv=u(ks[5], (D,), inv(D)),
        wo=u(ks[6], (D, D), inv(D)), bo=u(ks[7], (D,), inv(D)),
        genc=jnp.ones((D,), jnp.float32), benc=jnp.zeros((D,), jnp.float32),
        # fan_in_uniform_init uses tensor.size(-1): weights -> in_features,
        # biases -> their own length (= out_features).
        w1=u(ks[8], (STATE_DIM, H0), inv(STATE_DIM)),
        b1=u(ks[9], (H0,), inv(H0)),
        g1=jnp.ones((H0,), jnp.float32), be1=jnp.zeros((H0,), jnp.float32),
        w2=u(ks[10], (H0 + ACTION_DIM, H1), inv(H0 + ACTION_DIM)),
        b2=u(ks[11], (H1,), inv(H1)),
        g2=jnp.ones((H1,), jnp.float32), be2=jnp.zeros((H1,), jnp.float32),
        wV=u(ks[12], (H1, 1), WEIGHTS_FINAL_INIT),
        bV=u(ks[13], (1,), BIAS_FINAL_INIT),
    )


def pack_params(p):
    """Pack parameters into two lane-dense fp32 slabs (mats, vecs).

    Folds: attention scale into Wq/bq; Wv_h@Wo_h into Wvo_h; bo + bv_h@Wo_h
    into a single encoder bias row (softmax rows sum to 1).
    """
    pn = {k: np.asarray(v, np.float32) for k, v in p.items()}
    scale = 1.0 / np.sqrt(float(DK))

    mats = np.zeros((MAT_ROWS, LANES), np.float32)
    vecs = np.zeros((VEC_ROWS, LANES), np.float32)

    bo_tot = pn['bo'].copy()
    for h in range(NUM_HEADS):
        hs = slice(h * DK, (h + 1) * DK)
        wo_h = pn['wo'][hs, :]                                     # (DK, D)
        mats[R_WENC:R_WENC + D, 2 * DK * h:2 * DK * h + DK] = pn['wq'][:, hs] * scale
        mats[R_WENC:R_WENC + D, 2 * DK * h + DK:2 * DK * (h + 1)] = pn['wk'][:, hs]
        mats[R_WENC:R_WENC + D, 2 * D + D * h:2 * D + D * (h + 1)] = pn['wv'][:, hs] @ wo_h
        vecs[V_BPROJ, 2 * DK * h:2 * DK * h + DK] = pn['bq'][hs] * scale
        vecs[V_BPROJ, 2 * DK * h + DK:2 * DK * (h + 1)] = pn['bk'][hs]
        bo_tot = bo_tot + pn['bv'][hs] @ wo_h

    mats[R_WH:R_WH + STATE_DIM, 0:H0] = pn['w1']
    mats[R_WH:R_WH + H0 + ACTION_DIM, LANES - H1:] = pn['w2']

    vecs[V_BO, 0:D] = bo_tot
    vecs[V_GENC, 0:D] = pn['genc']
    vecs[V_BENC, 0:D] = pn['benc']
    vecs[V_B1, 0:H0] = pn['b1']
    vecs[V_G1, 0:H0] = pn['g1']
    vecs[V_BE1, 0:H0] = pn['be1']
    vecs[V_B2, 0:H1] = pn['b2']
    vecs[V_G2, 0:H1] = pn['g2']
    vecs[V_BE2, 0:H1] = pn['be2']
    vecs[V_WV, 0:H1] = pn['wV'][:, 0]
    vecs[V_BV, 0] = float(pn['bV'][0])
    return jnp.asarray(mats), jnp.asarray(vecs)


def reference_forward(x, actions, p):
    """Pure-JAX fp32 reference of the assumed forward pass (unfolded params)."""
    def ln(z, g, b):
        mu = jnp.mean(z, axis=-1, keepdims=True)
        var = jnp.mean((z - mu) ** 2, axis=-1, keepdims=True)
        return (z - mu) * jax.lax.rsqrt(var + LN_EPS) * g + b

    hi = jax.lax.Precision.HIGHEST
    scale = 1.0 / np.sqrt(float(DK))
    q = jnp.einsum('bsd,de->bse', x, p['wq'], precision=hi) + p['bq']
    k = jnp.einsum('bsd,de->bse', x, p['wk'], precision=hi) + p['bk']
    v = jnp.einsum('bsd,de->bse', x, p['wv'], precision=hi) + p['bv']
    heads = []
    for h in range(NUM_HEADS):
        hs = slice(h * DK, (h + 1) * DK)
        s = jnp.einsum('bqd,bkd->bqk', q[..., hs], k[..., hs], precision=hi) * scale
        a = jax.nn.softmax(s, axis=-1)
        heads.append(jnp.einsum('bqk,bkd->bqd', a, v[..., hs], precision=hi))
    ctx = jnp.concatenate(heads, axis=-1)
    attn = jnp.einsum('bsd,de->bse', ctx, p['wo'], precision=hi) + p['bo']
    enc = ln(x + attn, p['genc'], p['benc'])
    flat = enc.reshape(x.shape[0], -1)
    h1 = jax.nn.relu(ln(jnp.dot(flat, p['w1'], precision=hi) + p['b1'],
                        p['g1'], p['be1']))
    cat = jnp.concatenate([h1, actions], axis=-1)
    h2 = jax.nn.relu(ln(jnp.dot(cat, p['w2'], precision=hi) + p['b2'],
                        p['g2'], p['be2']))
    return jnp.dot(h2, p['wV'], precision=hi) + p['bV']


if __name__ == "__main__":
    root = jax.random.PRNGKey(0)
    k_x, k_a, k_p = jax.random.split(root, 3)

    B = 2
    x = jax.random.normal(k_x, (B, S, D), jnp.float32)
    actions = jax.random.normal(k_a, (B, ACTION_DIM), jnp.float32)
    params = make_params(k_p)
    mats, vecs = pack_params(params)

    v_out = critic_forward(x, actions, mats, vecs)
    jax.block_until_ready(v_out)
    assert v_out.shape == (B, 1) and v_out.dtype == jnp.float32
    assert bool(jnp.all(jnp.isfinite(v_out)))
    v_ref = reference_forward(x, actions, params)
    err = float(jnp.max(jnp.abs(v_out - v_ref)))
    assert err < 2e-3, f"kernel/reference mismatch: {err}"

    # Exercise the multi-tile ("parallel") grid path with a larger batch.
    B2 = 16
    x2 = jax.random.normal(k_x, (B2, S, D), jnp.float32)
    a2 = jax.random.normal(k_a, (B2, ACTION_DIM), jnp.float32)
    v2 = critic_forward(x2, a2, mats, vecs)
    jax.block_until_ready(v2)
    err2 = float(jnp.max(jnp.abs(v2 - reference_forward(x2, a2, params))))
    assert v2.shape == (B2, 1) and err2 < 2e-3, f"grid path mismatch: {err2}"

    print("KERNEL_OK")
</pallas_src>

<mosaic_0001>
module attributes {stable_mosaic.version = 11 : i64} {
  func.func @critic_kernel(%arg0: i32, %arg1: memref<64x16xf32, #tpu.memory_space<vmem>>, %arg2: memref<8x8xf32, #tpu.memory_space<vmem>>, %arg3: memref<144x128xf32, #tpu.memory_space<vmem>>, %arg4: memref<16x128xf32, #tpu.memory_space<vmem>>, %arg5: memref<8x128xf32, #tpu.memory_space<vmem>>) attributes {dimension_semantics = [#tpu.dimension_semantics<parallel>], iteration_bounds = array<i64: 1>, scalar_prefetch = 0 : i64, scratch_operands = 0 : i64, tpu.core_type = #tpu.core_type<tc>, window_params = [{transform_indices = @transform_0, window_bounds = array<i64: 64, 16>}, {transform_indices = @transform_1, window_bounds = array<i64: 8, 8>}, {pipeline_mode = #tpu.pipeline_mode<synchronous>, transform_indices = @transform_2, window_bounds = array<i64: 144, 128>}, {pipeline_mode = #tpu.pipeline_mode<synchronous>, transform_indices = @transform_3, window_bounds = array<i64: 16, 128>}, {transform_indices = @transform_4, window_bounds = array<i64: 8, 128>}]} {
    %c0 = arith.constant 0 : index
    %c0_0 = arith.constant 0 : index
    %0 = vector.load %arg1[%c0, %c0_0] : memref<64x16xf32, #tpu.memory_space<vmem>>, vector<64x16xf32>
    %c0_1 = arith.constant 0 : index
    %c0_2 = arith.constant 0 : index
    %1 = vector.load %arg2[%c0_1, %c0_2] : memref<8x8xf32, #tpu.memory_space<vmem>>, vector<8x8xf32>
    %c0_3 = arith.constant 0 : index
    %c0_4 = arith.constant 0 : index
    %2 = vector.load %arg3[%c0_3, %c0_4] : memref<144x128xf32, #tpu.memory_space<vmem>>, vector<16x64xf32>
    %cst = arith.constant dense<0.000000e+00> : vector<64x64xf32>
    %3 = tpu.matmul %0, %2, %cst {dimension_numbers = #tpu.dot_dimension_numbers<[1], [0], [0], [1], [0, 0, 1, 1], [], []>} : vector<64x16xf32>, vector<16x64xf32>, vector<64x64xf32> -> vector<64x64xf32>
    %c0_5 = arith.constant 0 : index
    %c0_6 = arith.constant 0 : index
    %4 = vector.load %arg4[%c0_5, %c0_6] : memref<16x128xf32, #tpu.memory_space<vmem>>, vector<1x64xf32>
    %5 = vector.broadcast %4 : vector<1x64xf32> to vector<64x64xf32>
    %6 = arith.addf %3, %5 : vector<64x64xf32>
    %7 = tpu.iota {dimensions = array<i32: 0>} : vector<64x64xi32>
    %8 = tpu.iota {dimensions = array<i32: 1>} : vector<64x64xi32>
    %c7_i32 = arith.constant 7 : i32
    %9 = vector.broadcast %c7_i32 : i32 to vector<64x64xi32>
    %10 = arith.andi %7, %9 : vector<64x64xi32>
    %c7_i32_7 = arith.constant 7 : i32
    %11 = vector.broadcast %c7_i32_7 : i32 to vector<64x64xi32>
    %12 = arith.andi %8, %11 : vector<64x64xi32>
    %13 = arith.cmpi eq, %10, %12 : vector<64x64xi32>
    %cst_8 = arith.constant 0.000000e+00 : f32
    %cst_9 = arith.constant -1.000000e+30 : f32
    %14 = vector.broadcast %cst_8 : f32 to vector<64x64xf32>
    %15 = vector.broadcast %cst_9 : f32 to vector<64x64xf32>
    %16 = arith.select %13, %14, %15 : vector<64x64xi1>, vector<64x64xf32>
    %c1 = arith.constant 1 : index
    %c0_10 = arith.constant 0 : index
    %17 = vector.load %arg4[%c1, %c0_10] : memref<16x128xf32, #tpu.memory_space<vmem>>, vector<1x16xf32>
    %18 = vector.extract_strided_slice %6 {offsets = [0, 0], sizes = [64, 8], strides = [1, 1]} : vector<64x64xf32> to vector<64x8xf32>
    %19 = vector.extract_strided_slice %6 {offsets = [0, 8], sizes = [64, 8], strides = [1, 1]} : vector<64x64xf32> to vector<64x8xf32>
    %20 = vector.extract_strided_slice %6 {offsets = [0, 32], sizes = [64, 16], strides = [1, 1]} : vector<64x64xf32> to vector<64x16xf32>
    "tpu.trace_start"() <{level = 10 : i32, message = "qd,kd->qk"}> : () -> ()
    %cst_11 = arith.constant dense<0.000000e+00> : vector<64x64xf32>
    %21 = tpu.matmul %18, %19, %cst_11 {dimension_numbers = #tpu.dot_dimension_numbers<[1], [1], [0], [0], [0, 0, 1, 0], [], []>} : vector<64x8xf32>, vector<64x8xf32>, vector<64x64xf32> -> vector<64x64xf32>
    "tpu.trace_stop"() : () -> ()
    %22 = arith.addf %21, %16 : vector<64x64xf32>
    %cst_12 = arith.constant dense<0xFF800000> : vector<64xf32>
    %23 = vector.multi_reduction <maximumf>, %22, %cst_12 [1] : vector<64x64xf32> to vector<64xf32>
    %24 = vector.shape_cast %23 : vector<64xf32> to vector<64x1xf32>
    %25 = vector.broadcast %24 : vector<64x1xf32> to vector<64x64xf32>
    %26 = arith.subf %22, %25 : vector<64x64xf32>
    %27 = math.exp %26 : vector<64x64xf32>
    %cst_13 = arith.constant dense<0.000000e+00> : vector<64xf32>
    %28 = vector.multi_reduction <add>, %27, %cst_13 [1] : vector<64x64xf32> to vector<64xf32>
    %29 = vector.shape_cast %28 : vector<64xf32> to vector<64x1xf32>
    %30 = tpu.reciprocal %29 {approx = true} : vector<64x1xf32> -> vector<64x1xf32>
    %31 = vector.broadcast %30 : vector<64x1xf32> to vector<64x64xf32>
    %32 = arith.mulf %27, %31 : vector<64x64xf32>
    %cst_14 = arith.constant dense<0.000000e+00> : vector<64x16xf32>
    %33 = tpu.matmul %32, %20, %cst_14 {dimension_numbers = #tpu.dot_dimension_numbers<[1], [0], [0], [1], [0, 0, 1, 1], [], []>} : vector<64x64xf32>, vector<64x16xf32>, vector<64x16xf32> -> vector<64x16xf32>
    %34 = vector.broadcast %17 : vector<1x16xf32> to vector<64x16xf32>
    %35 = arith.addf %34, %33 : vector<64x16xf32>
    %36 = vector.extract_strided_slice %6 {offsets = [0, 16], sizes = [64, 8], strides = [1, 1]} : vector<64x64xf32> to vector<64x8xf32>
    %37 = vector.extract_strided_slice %6 {offsets = [0, 24], sizes = [64, 8], strides = [1, 1]} : vector<64x64xf32> to vector<64x8xf32>
    %38 = vector.extract_strided_slice %6 {offsets = [0, 48], sizes = [64, 16], strides = [1, 1]} : vector<64x64xf32> to vector<64x16xf32>
    "tpu.trace_start"() <{level = 10 : i32, message = "qd,kd->qk"}> : () -> ()
    %cst_15 = arith.constant dense<0.000000e+00> : vector<64x64xf32>
    %39 = tpu.matmul %36, %37, %cst_15 {dimension_numbers = #tpu.dot_dimension_numbers<[1], [1], [0], [0], [0, 0, 1, 0], [], []>} : vector<64x8xf32>, vector<64x8xf32>, vector<64x64xf32> -> vector<64x64xf32>
    "tpu.trace_stop"() : () -> ()
    %40 = arith.addf %39, %16 : vector<64x64xf32>
    %cst_16 = arith.constant dense<0xFF800000> : vector<64xf32>
    %41 = vector.multi_reduction <maximumf>, %40, %cst_16 [1] : vector<64x64xf32> to vector<64xf32>
    %42 = vector.shape_cast %41 : vector<64xf32> to vector<64x1xf32>
    %43 = vector.broadcast %42 : vector<64x1xf32> to vector<64x64xf32>
    %44 = arith.subf %40, %43 : vector<64x64xf32>
    %45 = math.exp %44 : vector<64x64xf32>
    %cst_17 = arith.constant dense<0.000000e+00> : vector<64xf32>
    %46 = vector.multi_reduction <add>, %45, %cst_17 [1] : vector<64x64xf32> to vector<64xf32>
    %47 = vector.shape_cast %46 : vector<64xf32> to vector<64x1xf32>
    %48 = tpu.reciprocal %47 {approx = true} : vector<64x1xf32> -> vector<64x1xf32>
    %49 = vector.broadcast %48 : vector<64x1xf32> to vector<64x64xf32>
    %50 = arith.mulf %45, %49 : vector<64x64xf32>
    %cst_18 = arith.constant dense<0.000000e+00> : vector<64x16xf32>
    %51 = tpu.matmul %50, %38, %cst_18 {dimension_numbers = #tpu.dot_dimension_numbers<[1], [0], [0], [1], [0, 0, 1, 1], [], []>} : vector<64x64xf32>, vector<64x16xf32>, vector<64x16xf32> -> vector<64x16xf32>
    %52 = arith.addf %35, %51 : vector<64x16xf32>
    %53 = arith.addf %0, %52 : vector<64x16xf32>
    %c2 = arith.constant 2 : index
    %c0_19 = arith.constant 0 : index
    %54 = vector.load %arg4[%c2, %c0_19] : memref<16x128xf32, #tpu.memory_space<vmem>>, vector<1x16xf32>
    %c3 = arith.constant 3 : index
    %c0_20 = arith.constant 0 : index
    %55 = vector.load %arg4[%c3, %c0_20] : memref<16x128xf32, #tpu.memory_space<vmem>>, vector<1x16xf32>
    %cst_21 = arith.constant dense<0.000000e+00> : vector<64xf32>
    %56 = vector.multi_reduction <add>, %53, %cst_21 [1] : vector<64x16xf32> to vector<64xf32>
    %57 = vector.shape_cast %56 : vector<64xf32> to vector<64x1xf32>
    %cst_22 = arith.constant 1.600000e+01 : f32
    %58 = vector.broadcast %cst_22 : f32 to vector<64x1xf32>
    %59 = arith.divf %57, %58 : vector<64x1xf32>
    %60 = vector.broadcast %59 : vector<64x1xf32> to vector<64x16xf32>
    %61 = arith.subf %53, %60 : vector<64x16xf32>
    %62 = arith.mulf %61, %61 : vector<64x16xf32>
    %cst_23 = arith.constant dense<0.000000e+00> : vector<64xf32>
    %63 = vector.multi_reduction <add>, %62, %cst_23 [1] : vector<64x16xf32> to vector<64xf32>
    %64 = vector.shape_cast %63 : vector<64xf32> to vector<64x1xf32>
    %cst_24 = arith.constant 1.600000e+01 : f32
    %65 = vector.broadcast %cst_24 : f32 to vector<64x1xf32>
    %66 = arith.divf %64, %65 : vector<64x1xf32>
    %67 = vector.broadcast %59 : vector<64x1xf32> to vector<64x16xf32>
    %68 = arith.subf %53, %67 : vector<64x16xf32>
    %cst_25 = arith.constant 9.99999974E-6 : f32
    %69 = vector.broadcast %cst_25 : f32 to vector<64x1xf32>
    %70 = arith.addf %66, %69 : vector<64x1xf32>
    %71 = math.rsqrt %70 : vector<64x1xf32>
    %72 = vector.broadcast %71 : vector<64x1xf32> to vector<64x16xf32>
    %73 = arith.mulf %68, %72 : vector<64x16xf32>
    %74 = vector.broadcast %54 : vector<1x16xf32> to vector<64x16xf32>
    %75 = arith.mulf %73, %74 : vector<64x16xf32>
    %76 = vector.broadcast %55 : vector<1x16xf32> to vector<64x16xf32>
    %77 = arith.addf %75, %76 : vector<64x16xf32>
    %78 = vector.extract_strided_slice %77 {offsets = [0, 0], sizes = [8, 16], strides = [1, 1]} : vector<64x16xf32> to vector<8x16xf32>
    %79 = vector.extract_strided_slice %77 {offsets = [8, 0], sizes = [8, 16], strides = [1, 1]} : vector<64x16xf32> to vector<8x16xf32>
    %80 = vector.extract_strided_slice %77 {offsets = [16, 0], sizes = [8, 16], strides = [1, 1]} : vector<64x16xf32> to vector<8x16xf32>
    %81 = vector.extract_strided_slice %77 {offsets = [24, 0], sizes = [8, 16], strides = [1, 1]} : vector<64x16xf32> to vector<8x16xf32>
    %82 = vector.extract_strided_slice %77 {offsets = [32, 0], sizes = [8, 16], strides = [1, 1]} : vector<64x16xf32> to vector<8x16xf32>
    %83 = vector.extract_strided_slice %77 {offsets = [40, 0], sizes = [8, 16], strides = [1, 1]} : vector<64x16xf32> to vector<8x16xf32>
    %84 = vector.extract_strided_slice %77 {offsets = [48, 0], sizes = [8, 16], strides = [1, 1]} : vector<64x16xf32> to vector<8x16xf32>
    %85 = vector.extract_strided_slice %77 {offsets = [56, 0], sizes = [8, 16], strides = [1, 1]} : vector<64x16xf32> to vector<8x16xf32>
    %86 = tpu.concatenate %78, %79, %80, %81, %82, %83, %84, %85 in 1 : vector<8x16xf32>, vector<8x16xf32>, vector<8x16xf32>, vector<8x16xf32>, vector<8x16xf32>, vector<8x16xf32>, vector<8x16xf32>, vector<8x16xf32> -> vector<8x128xf32>
    %c16 = arith.constant 16 : index
    %c0_26 = arith.constant 0 : index
    %87 = vector.load %arg3[%c16, %c0_26] : memref<144x128xf32, #tpu.memory_space<vmem>>, vector<128x64xf32>
    %cst_27 = arith.constant dense<0.000000e+00> : vector<8x64xf32>
    %88 = tpu.matmul %86, %87, %cst_27 {dimension_numbers = #tpu.dot_dimension_numbers<[1], [0], [0], [1], [0, 0, 1, 1], [], []>} : vector<8x128xf32>, vector<128x64xf32>, vector<8x64xf32> -> vector<8x64xf32>
    %c4 = arith.constant 4 : index
    %c0_28 = arith.constant 0 : index
    %89 = vector.load %arg4[%c4, %c0_28] : memref<16x128xf32, #tpu.memory_space<vmem>>, vector<1x64xf32>
    %90 = vector.broadcast %89 : vector<1x64xf32> to vector<8x64xf32>
    %91 = arith.addf %88, %90 : vector<8x64xf32>
    %c5 = arith.constant 5 : index
    %c0_29 = arith.constant 0 : index
    %92 = vector.load %arg4[%c5, %c0_29] : memref<16x128xf32, #tpu.memory_space<vmem>>, vector<1x64xf32>
    %c6 = arith.constant 6 : index
    %c0_30 = arith.constant 0 : index
    %93 = vector.load %arg4[%c6, %c0_30] : memref<16x128xf32, #tpu.memory_space<vmem>>, vector<1x64xf32>
    %cst_31 = arith.constant dense<0.000000e+00> : vector<8xf32>
    %94 = vector.multi_reduction <add>, %91, %cst_31 [1] : vector<8x64xf32> to vector<8xf32>
    %95 = vector.shape_cast %94 : vector<8xf32> to vector<8x1xf32>
    %cst_32 = arith.constant 6.400000e+01 : f32
    %96 = vector.broadcast %cst_32 : f32 to vector<8x1xf32>
    %97 = arith.divf %95, %96 : vector<8x1xf32>
    %98 = vector.broadcast %97 : vector<8x1xf32> to vector<8x64xf32>
    %99 = arith.subf %91, %98 : vector<8x64xf32>
    %100 = arith.mulf %99, %99 : vector<8x64xf32>
    %cst_33 = arith.constant dense<0.000000e+00> : vector<8xf32>
    %101 = vector.multi_reduction <add>, %100, %cst_33 [1] : vector<8x64xf32> to vector<8xf32>
    %102 = vector.shape_cast %101 : vector<8xf32> to vector<8x1xf32>
    %cst_34 = arith.constant 6.400000e+01 : f32
    %103 = vector.broadcast %cst_34 : f32 to vector<8x1xf32>
    %104 = arith.divf %102, %103 : vector<8x1xf32>
    %105 = vector.broadcast %97 : vector<8x1xf32> to vector<8x64xf32>
    %106 = arith.subf %91, %105 : vector<8x64xf32>
    %cst_35 = arith.constant 9.99999974E-6 : f32
    %107 = vector.broadcast %cst_35 : f32 to vector<8x1xf32>
    %108 = arith.addf %104, %107 : vector<8x1xf32>
    %109 = math.rsqrt %108 : vector<8x1xf32>
    %110 = vector.broadcast %109 : vector<8x1xf32> to vector<8x64xf32>
    %111 = arith.mulf %106, %110 : vector<8x64xf32>
    %112 = vector.broadcast %92 : vector<1x64xf32> to vector<8x64xf32>
    %113 = arith.mulf %111, %112 : vector<8x64xf32>
    %114 = vector.broadcast %93 : vector<1x64xf32> to vector<8x64xf32>
    %115 = arith.addf %113, %114 : vector<8x64xf32>
    %cst_36 = arith.constant 0.000000e+00 : f32
    %116 = vector.broadcast %cst_36 : f32 to vector<8x64xf32>
    %117 = arith.maximumf %115, %116 : vector<8x64xf32>
    %118 = tpu.concatenate %117, %1 in 1 : vector<8x64xf32>, vector<8x8xf32> -> vector<8x72xf32>
    %c16_37 = arith.constant 16 : index
    %c0_38 = arith.constant 0 : index
    %119 = vector.load %arg3[%c16_37, %c0_38] : memref<144x128xf32, #tpu.memory_space<vmem>>, vector<72x128xf32>
    %cst_39 = arith.constant dense<0.000000e+00> : vector<8x128xf32>
    %120 = tpu.matmul %118, %119, %cst_39 {dimension_numbers = #tpu.dot_dimension_numbers<[1], [0], [0], [1], [0, 0, 1, 1], [], []>} : vector<8x72xf32>, vector<72x128xf32>, vector<8x128xf32> -> vector<8x128xf32>
    %121 = vector.extract_strided_slice %120 {offsets = [0, 64], sizes = [8, 64], strides = [1, 1]} : vector<8x128xf32> to vector<8x64xf32>
    %c7 = arith.constant 7 : index
    %c0_40 = arith.constant 0 : index
    %122 = vector.load %arg4[%c7, %c0_40] : memref<16x128xf32, #tpu.memory_space<vmem>>, vector<1x64xf32>
    %123 = vector.broadcast %122 : vector<1x64xf32> to vector<8x64xf32>
    %124 = arith.addf %121, %123 : vector<8x64xf32>
    %c8 = arith.constant 8 : index
    %c0_41 = arith.constant 0 : index
    %125 = vector.load %arg4[%c8, %c0_41] : memref<16x128xf32, #tpu.memory_space<vmem>>, vector<1x64xf32>
    %c9 = arith.constant 9 : index
    %c0_42 = arith.constant 0 : index
    %126 = vector.load %arg4[%c9, %c0_42] : memref<16x128xf32, #tpu.memory_space<vmem>>, vector<1x64xf32>
    %cst_43 = arith.constant dense<0.000000e+00> : vector<8xf32>
    %127 = vector.multi_reduction <add>, %124, %cst_43 [1] : vector<8x64xf32> to vector<8xf32>
    %128 = vector.shape_cast %127 : vector<8xf32> to vector<8x1xf32>
    %cst_44 = arith.constant 6.400000e+01 : f32
    %129 = vector.broadcast %cst_44 : f32 to vector<8x1xf32>
    %130 = arith.divf %128, %129 : vector<8x1xf32>
    %131 = vector.broadcast %130 : vector<8x1xf32> to vector<8x64xf32>
    %132 = arith.subf %124, %131 : vector<8x64xf32>
    %133 = arith.mulf %132, %132 : vector<8x64xf32>
    %cst_45 = arith.constant dense<0.000000e+00> : vector<8xf32>
    %134 = vector.multi_reduction <add>, %133, %cst_45 [1] : vector<8x64xf32> to vector<8xf32>
    %135 = vector.shape_cast %134 : vector<8xf32> to vector<8x1xf32>
    %cst_46 = arith.constant 6.400000e+01 : f32
    %136 = vector.broadcast %cst_46 : f32 to vector<8x1xf32>
    %137 = arith.divf %135, %136 : vector<8x1xf32>
    %138 = vector.broadcast %130 : vector<8x1xf32> to vector<8x64xf32>
    %139 = arith.subf %124, %138 : vector<8x64xf32>
    %cst_47 = arith.constant 9.99999974E-6 : f32
    %140 = vector.broadcast %cst_47 : f32 to vector<8x1xf32>
    %141 = arith.addf %137, %140 : vector<8x1xf32>
    %142 = math.rsqrt %141 : vector<8x1xf32>
    %143 = vector.broadcast %142 : vector<8x1xf32> to vector<8x64xf32>
    %144 = arith.mulf %139, %143 : vector<8x64xf32>
    %145 = vector.broadcast %125 : vector<1x64xf32> to vector<8x64xf32>
    %146 = arith.mulf %144, %145 : vector<8x64xf32>
    %147 = vector.broadcast %126 : vector<1x64xf32> to vector<8x64xf32>
    %148 = arith.addf %146, %147 : vector<8x64xf32>
    %cst_48 = arith.constant 0.000000e+00 : f32
    %149 = vector.broadcast %cst_48 : f32 to vector<8x64xf32>
    %150 = arith.maximumf %148, %149 : vector<8x64xf32>
    %c10 = arith.constant 10 : index
    %c0_49 = arith.constant 0 : index
    %151 = vector.load %arg4[%c10, %c0_49] : memref<16x128xf32, #tpu.memory_space<vmem>>, vector<1x64xf32>
    %152 = vector.broadcast %151 : vector<1x64xf32> to vector<8x64xf32>
    %153 = arith.mulf %150, %152 : vector<8x64xf32>
    %cst_50 = arith.constant dense<0.000000e+00> : vector<8xf32>
    %154 = vector.multi_reduction <add>, %153, %cst_50 [1] : vector<8x64xf32> to vector<8xf32>
    %155 = vector.shape_cast %154 : vector<8xf32> to vector<8x1xf32>
    %c11 = arith.constant 11 : index
    %c0_51 = arith.constant 0 : index
    %156 = vector.load %arg4[%c11, %c0_51] : memref<16x128xf32, #tpu.memory_space<vmem>>, vector<1x1xf32>
    %157 = vector.broadcast %156 : vector<1x1xf32> to vector<8x1xf32>
    %158 = arith.addf %155, %157 : vector<8x1xf32>
    %159 = vector.shape_cast %158 : vector<8x1xf32> to vector<8x1xf32>
    %160 = vector.broadcast %159 : vector<8x1xf32> to vector<8x128xf32>
    %c0_52 = arith.constant 0 : index
    %c0_53 = arith.constant 0 : index
    %161 = vector.load %arg5[%c0_52, %c0_53] : memref<8x128xf32, #tpu.memory_space<vmem>>, vector<8x128xf32>
    tpu.vector_store %arg5[%c0_52, %c0_53], %160 {strides = array<i32>} : memref<8x128xf32, #tpu.memory_space<vmem>>, vector<8x128xf32>,
    return
  }
  func.func @transform_0(%arg0: i32) -> (i32, i32) {
    %c0_i32 = arith.constant 0 : i32
    %c0_i32_0 = arith.constant 0 : i32
    return %arg0, %c0_i32 : i32, i32
  }
  func.func @transform_1(%arg0: i32) -> (i32, i32) {
    %c0_i32 = arith.constant 0 : i32
    %c0_i32_0 = arith.constant 0 : i32
    return %arg0, %c0_i32 : i32, i32
  }
  func.func @transform_2(%arg0: i32) -> (i32, i32) {
    %c0_i32 = arith.constant 0 : i32
    %c0_i32_0 = arith.constant 0 : i32
    %c0_i32_1 = arith.constant 0 : i32
    return %c0_i32, %c0_i32_0 : i32, i32
  }
  func.func @transform_3(%arg0: i32) -> (i32, i32) {
    %c0_i32 = arith.constant 0 : i32
    %c0_i32_0 = arith.constant 0 : i32
    %c0_i32_1 = arith.constant 0 : i32
    return %c0_i32, %c0_i32_0 : i32, i32
  }
  func.func @transform_4(%arg0: i32) -> (i32, i32) {
    %c0_i32 = arith.constant 0 : i32
    %c0_i32_0 = arith.constant 0 : i32
    return %arg0, %c0_i32 : i32, i32
  }
}

</mosaic_0001>

<llo_original>
// kernel: critic_forward.1
$region0: #{critic_forward.1}
  #allocation0 [shape = 'u32[]', space=smem, size = 0x4, offset = 0x4, fixed_abs, tag = 'smem constant byte address 0x4 - core index']
  #allocation1 [shape = 'u32[144,128]{1,0:T(1,128)}', space=vmem, size = 0x12000, scoped, tag = 'internal scratch']
  %s0 = inlined_call_operand.vmem [shape: f32[64,16], index: 0, kind: input, shape index: {}]
  %s1 = inlined_call_operand.vmem [shape: f32[8,8], index: 1, kind: input, shape index: {}]
  %s2 = inlined_call_operand.vmem [shape: f32[144,128], index: 2, kind: input, shape index: {}]
  %s3 = inlined_call_operand.vmem [shape: f32[16,128], index: 3, kind: input, shape index: {}]
  %s4 = inlined_call_operand.vmem [shape: f32[8,128], index: 4, kind: output, shape index: {}]
  %s5 = sld [smem:[#allocation0]]
  $region26: #{critic_forward.1} parent=0
    _
  %s7 = ssub.s32 1, %s5
  %s8 = scalar_select 0, %s7, %s5
  // Predicated region
  $region2: #{critic_forward.1} parent=0 // pred_check
    _
  $region3: #{critic_forward.1} parent=0 // pred_check_branch
    %10 = sbr.rel (0) target = $region5
  $region4: #{critic_forward.1} parent=0 // pred_region
    _
  $region5: #{critic_forward.1} parent=0 // pred_fallthru
    _
  // Predicated region
  $region6: #{critic_forward.1} parent=0 // pred_check
    _
  $region7: #{critic_forward.1} parent=0 // pred_check_branch
    %12 = sbr.rel (0) target = $region9
  $region8: #{critic_forward.1} parent=0 // pred_region
    _
  $region9: #{critic_forward.1} parent=0 // pred_fallthru
    _
  // Predicated region
  $region10: #{critic_forward.1} parent=0 // pred_check
    _
  $region11: #{critic_forward.1} parent=0 // pred_check_branch
    %14 = sbr.rel (0) target = $region13
  $region12: #{critic_forward.1} parent=0 // pred_region
    _
  $region13: #{critic_forward.1} parent=0 // pred_fallthru
    _
  // Predicated region
  $region14: #{critic_forward.1} parent=0 // pred_check
    _
  $region15: #{critic_forward.1} parent=0 // pred_check_branch
    %16 = sbr.rel (0) target = $region17
  $region16: #{critic_forward.1} parent=0 // pred_region
    _
  $region17: #{critic_forward.1} parent=0 // pred_fallthru
    _
  %v17 = vld [vmem:[%s0] sm:$0xff]
  %v18 = vld [vmem:[%s0 + $0x8] sm:$0xff]
  %v19 = vld [vmem:[%s0 + $0x10] sm:$0xff]
  %v20 = vld [vmem:[%s0 + $0x18] sm:$0xff]
  %v21 = vld [vmem:[%s0 + $0x20] sm:$0xff]
  %v22 = vld [vmem:[%s0 + $0x28] sm:$0xff]
  %v23 = vld [vmem:[%s0 + $0x30] sm:$0xff]
  %v24 = vld [vmem:[%s0 + $0x38] sm:$0xff]
  %v25 = vld [vmem:[%s1] sm:$0xff]
  %v26 = vld [vmem:[%s2] sm:$0xff]
  %v27 = vld [vmem:[%s2 + $0x8] sm:$0xff]
  %v28 = vld [vmem:[%s3] sm:$0x1]
  %v29 = vlaneseq
  %v30 = vshrl.u32 %v29, 7
  %v31 = vsub.s32 0, %v30
  %v32 = vrot.slane %v28, %v31
  %vm33 = vcmask 130048
  %v35 = vsel %vm33, %v17, 0
  %v38 = vsel %vm33, %v18, 0
  %v41 = vsel %vm33, %v19, 0
  %v44 = vsel %vm33, %v20, 0
  %v47 = vsel %vm33, %v21, 0
  %v50 = vsel %vm33, %v22, 0
  %v53 = vsel %vm33, %v23, 0
  %v56 = vsel %vm33, %v24, 0
  %58 = vmatprep.subr.mxu0 0.0
  %59 = vmatpush1.msra.mxu0 %v26
  %60 = vmatprep.subr.mxu0 0.0
  %61 = vmatpush1.msra.mxu0 %v27
  %62 = vmatprep.subr.mxu0 0.0
  %63 = vmatpush1.msra.mxu0 0.0
  %64 = vmatprep.subr.mxu0 0.0
  %65 = vmatpush1.msra.mxu0 0.0
  %66 = vmatprep.subr.mxu0 0.0
  %67 = vmatpush1.msra.mxu0 0.0
  %68 = vmatprep.subr.mxu0 0.0
  %69 = vmatpush1.msra.mxu0 0.0
  %70 = vmatprep.subr.mxu0 0.0
  %71 = vmatpush1.msra.mxu0 0.0
  %72 = vmatprep.subr.mxu0 0.0
  %73 = vmatpush1.msra.mxu0 0.0
  %74 = vmatprep.subr.mxu0 0.0
  %75 = vmatpush1.msra.mxu0 0.0
  %76 = vmatprep.subr.mxu0 0.0
  %77 = vmatpush1.msra.mxu0 0.0
  %78 = vmatprep.subr.mxu0 0.0
  %79 = vmatpush1.msra.mxu0 0.0
  %80 = vmatprep.subr.mxu0 0.0
  %81 = vmatpush1.msra.mxu0 0.0
  %82 = vmatprep.subr.mxu0 0.0
  %83 = vmatpush1.msra.mxu0 0.0
  %84 = vmatprep.subr.mxu0 0.0
  %85 = vmatpush1.msra.mxu0 0.0
  %86 = vmatprep.subr.mxu0 0.0
  %87 = vmatpush1.msra.mxu0 0.0
  %88 = vmatprep.subr.mxu0 0.0
  %89 = vmatpush1.msra.mxu0 0.0
  %90 = vmatprep.subr.mxu0 0.0
  %91 = vmatpush1.msra.mxu0 0.0
  %92 = vmatprep.subr.mxu0 0.0
  %93 = vmatpush1.msra.mxu0 0.0
  %94 = vmatprep.subr.mxu0 0.0
  %95 = vmatpush1.msra.mxu0 0.0
  %96 = vmatprep.subr.mxu0 0.0
  %97 = vmatpush1.msra.mxu0 0.0
  %98 = vmatprep.subr.mxu0 0.0
  %99 = vmatpush1.msra.mxu0 0.0
  %100 = vmatprep.subr.mxu0 0.0
  %101 = vmatpush1.msra.mxu0 0.0
  %102 = vmatprep.subr.mxu0 0.0
  %103 = vmatpush1.msra.mxu0 0.0
  %104 = vmatprep.subr.mxu0 0.0
  %105 = vmatpush1.msra.mxu0 0.0
  %106 = vmatprep.subr.mxu0 0.0
  %107 = vmatpush1.msra.mxu0 0.0
  %108 = vmatprep.subr.mxu0 0.0
  %109 = vmatpush1.msra.mxu0 0.0
  %110 = vmatprep.subr.mxu0 0.0
  %111 = vmatpush1.msra.mxu0 0.0
  %112 = vmatprep.subr.mxu0 0.0
  %113 = vmatpush1.msra.mxu0 0.0
  %114 = vmatprep.subr.mxu0 0.0
  %115 = vmatpush1.msra.mxu0 0.0
  %116 = vmatprep.subr.mxu0 0.0
  %117 = vmatpush1.msra.mxu0 0.0
  %118 = vmatprep.subr.mxu0 0.0
  %119 = vmatpush1.msra.mxu0 0.0
  %120 = vmatprep.subr.mxu0 0.0
  %121 = vmatpush1.msra.mxu0 0.0
  %122 = vmatprep.mubr.f32.mxu0 0.0
  %123 = vmatmul.mubr.f32.gmra.mrb[0].mxu0 %v35
  %v124 = vpop.f32.mrb[0].mxu0
  %v125 = vadd.f32 %v32, %v124
  %v126 = vpop.f32.mrb[0].mxu0
  %127 = vmatprep.mubr.f32.mxu0 0.0
  %128 = vmatmul.mubr.f32.gmra.mrb[0].mxu0 %v38
  %v129 = vpop.f32.mrb[0].mxu0
  %v130 = vadd.f32 %v32, %v129
  %v131 = vpop.f32.mrb[0].mxu0
  %132 = vmatprep.mubr.f32.mxu0 0.0
  %133 = vmatmul.mubr.f32.gmra.mrb[0].mxu0 %v41
  %v134 = vpop.f32.mrb[0].mxu0
  %v135 = vadd.f32 %v32, %v134
  %v136 = vpop.f32.mrb[0].mxu0
  %137 = vmatprep.mubr.f32.mxu0 0.0
  %138 = vmatmul.mubr.f32.gmra.mrb[0].mxu0 %v44
  %v139 = vpop.f32.mrb[0].mxu0
  %v140 = vadd.f32 %v32, %v139
  %v141 = vpop.f32.mrb[0].mxu0
  %142 = vmatprep.mubr.f32.mxu0 0.0
  %143 = vmatmul.mubr.f32.gmra.mrb[0].mxu0 %v47
  %v144 = vpop.f32.mrb[0].mxu0
  %v145 = vadd.f32 %v32, %v144
  %v146 = vpop.f32.mrb[0].mxu0
  %147 = vmatprep.mubr.f32.mxu0 0.0
  %148 = vmatmul.mubr.f32.gmra.mrb[0].mxu0 %v50
  %v149 = vpop.f32.mrb[0].mxu0
  %v150 = vadd.f32 %v32, %v149
  %v151 = vpop.f32.mrb[0].mxu0
  %152 = vmatprep.mubr.f32.mxu0 0.0
  %153 = vmatmul.mubr.f32.gmra.mrb[0].mxu0 %v53
  %v154 = vpop.f32.mrb[0].mxu0
  %v155 = vadd.f32 %v32, %v154
  %v156 = vpop.f32.mrb[0].mxu0
  %157 = vmatprep.mubr.f32.mxu0 0.0
  %158 = vmatmul.mubr.f32.gmra.mrb[0].mxu0 %v56
  %v159 = vpop.f32.mrb[0].mxu0
  %v160 = vadd.f32 %v32, %v159
  %v161 = vpop.f32.mrb[0].mxu0
  %162 = vdwg.mxu0
  %v163 = vlaneseq
  %v164 = vshrl.u32 %v163, 7
  %v165 = vadd.s32 %v164, 8
  %v166 = vadd.s32 %v164, 16
  %v167 = vadd.s32 %v164, 24
  %v168 = vadd.s32 %v164, 32
  %v169 = vadd.s32 %v164, 40
  %v170 = vadd.s32 %v164, 48
  %v171 = vadd.s32 %v164, 56
  %v172 = vlaneseq
  %v173 = vand.u32 %v172, 127
  %v174 = vand.u32 %v164, 7
  %v175 = vand.u32 %v165, 7
  %v176 = vand.u32 %v166, 7
  %v177 = vand.u32 %v167, 7
  %v178 = vand.u32 %v168, 7
  %v179 = vand.u32 %v169, 7
  %v180 = vand.u32 %v170, 7
  %v181 = vand.u32 %v171, 7
  %v182 = vand.u32 %v173, 7
  %vm183 = vcmp.eq.s32.totalorder %v174, %v182
  %vm184 = vcmp.eq.s32.totalorder %v175, %v182
  %vm185 = vcmp.eq.s32.totalorder %v176, %v182
  %vm186 = vcmp.eq.s32.totalorder %v177, %v182
  %vm187 = vcmp.eq.s32.totalorder %v178, %v182
  %vm188 = vcmp.eq.s32.totalorder %v179, %v182
  %vm189 = vcmp.eq.s32.totalorder %v180, %v182
  %vm190 = vcmp.eq.s32.totalorder %v181, %v182
  %v191 = vsel %vm183, 0.0, -1e+30
  %v192 = vsel %vm184, 0.0, -1e+30
  %v193 = vsel %vm185, 0.0, -1e+30
  %v194 = vsel %vm186, 0.0, -1e+30
  %v195 = vsel %vm187, 0.0, -1e+30
  %v196 = vsel %vm188, 0.0, -1e+30
  %v197 = vsel %vm189, 0.0, -1e+30
  %v198 = vsel %vm190, 0.0, -1e+30
  %v199 = vld [vmem:[%s3 + $0x1] sm:$0x1]
  %208 = vrot.lane.b32.xlu0 %v125, 120
  %v209 = vpop.permute.xlu0 %208
  %210 = vrot.lane.b32.xlu0 %v130, 120
  %v211 = vpop.permute.xlu0 %210
  %212 = vrot.lane.b32.xlu0 %v135, 120
  %v213 = vpop.permute.xlu0 %212
  %214 = vrot.lane.b32.xlu0 %v140, 120
  %v215 = vpop.permute.xlu0 %214
  %216 = vrot.lane.b32.xlu0 %v145, 120
  %v217 = vpop.permute.xlu0 %216
  %218 = vrot.lane.b32.xlu0 %v150, 120
  %v219 = vpop.permute.xlu0 %218
  %220 = vrot.lane.b32.xlu0 %v155, 120
  %v221 = vpop.permute.xlu0 %220
  %222 = vrot.lane.b32.xlu0 %v160, 120
  %v223 = vpop.permute.xlu0 %222
  %vm224 = vcmask 64512
  %v225 = vsel %vm224, %v125, 0
  %v227 = vsel %vm224, %v130, 0
  %v229 = vsel %vm224, %v135, 0
  %v231 = vsel %vm224, %v140, 0
  %v233 = vsel %vm224, %v145, 0
  %v235 = vsel %vm224, %v150, 0
  %v237 = vsel %vm224, %v155, 0
  %v239 = vsel %vm224, %v160, 0
  %v241 = vsel %vm224, %v209, 0
  %v243 = vsel %vm224, %v211, 0
  %v245 = vsel %vm224, %v213, 0
  %v247 = vsel %vm224, %v215, 0
  %v249 = vsel %vm224, %v217, 0
  %v251 = vsel %vm224, %v219, 0
  %v253 = vsel %vm224, %v221, 0
  %v255 = vsel %vm224, %v223, 0
  %257 = vmatprep.subr.mxu0 0.0
  %258 = vmatpush1.xpose.msra.mxu0 %v241
  %259 = vmatprep.subr.mxu0 0.0
  %260 = vmatpush1.xpose.msra.mxu0 %v243
  %261 = vmatprep.subr.mxu0 0.0
  %262 = vmatpush1.xpose.msra.mxu0 %v245
  %263 = vmatprep.subr.mxu0 0.0
  %264 = vmatpush1.xpose.msra.mxu0 %v247
  %265 = vmatprep.subr.mxu0 0.0
  %266 = vmatpush1.xpose.msra.mxu0 %v249
  %267 = vmatprep.subr.mxu0 0.0
  %268 = vmatpush1.xpose.msra.mxu0 %v251
  %269 = vmatprep.subr.mxu0 0.0
  %270 = vmatpush1.xpose.msra.mxu0 %v253
  %271 = vmatprep.subr.mxu0 0.0
  %272 = vmatpush1.xpose.msra.mxu0 %v255
  %273 = vmatprep.subr.mxu0 0.0
  %274 = vmatpush1.xpose.msra.mxu0 0.0
  %275 = vmatprep.subr.mxu0 0.0
  %276 = vmatpush1.xpose.msra.mxu0 0.0
  %277 = vmatprep.subr.mxu0 0.0
  %278 = vmatpush1.xpose.msra.mxu0 0.0
  %279 = vmatprep.subr.mxu0 0.0
  %280 = vmatpush1.xpose.msra.mxu0 0.0
  %281 = vmatprep.subr.mxu0 0.0
  %282 = vmatpush1.xpose.msra.mxu0 0.0
  %283 = vmatprep.subr.mxu0 0.0
  %284 = vmatpush1.xpose.msra.mxu0 0.0
  %285 = vmatprep.subr.mxu0 0.0
  %286 = vmatpush1.xpose.msra.mxu0 0.0
  %287 = vmatprep.subr.mxu0 0.0
  %288 = vmatpush1.xpose.msra.mxu0 0.0
  %289 = vmatprep.subr.mxu0 0.0
  %290 = vmatpush1.xpose.msra.mxu0 0.0
  %291 = vmatprep.subr.mxu0 0.0
  %292 = vmatpush1.xpose.msra.mxu0 0.0
  %293 = vmatprep.subr.mxu0 0.0
  %294 = vmatpush1.xpose.msra.mxu0 0.0
  %295 = vmatprep.subr.mxu0 0.0
  %296 = vmatpush1.xpose.msra.mxu0 0.0
  %297 = vmatprep.subr.mxu0 0.0
  %298 = vmatpush1.xpose.msra.mxu0 0.0
  %299 = vmatprep.subr.mxu0 0.0
  %300 = vmatpush1.xpose.msra.mxu0 0.0
  %301 = vmatprep.subr.mxu0 0.0
  %302 = vmatpush1.xpose.msra.mxu0 0.0
  %303 = vmatprep.subr.mxu0 0.0
  %304 = vmatpush1.xpose.msra.mxu0 0.0
  %305 = vmatprep.subr.mxu0 0.0
  %306 = vmatpush1.xpose.msra.mxu0 0.0
  %307 = vmatprep.subr.mxu0 0.0
  %308 = vmatpush1.xpose.msra.mxu0 0.0
  %309 = vmatprep.subr.mxu0 0.0
  %310 = vmatpush1.xpose.msra.mxu0 0.0
  %311 = vmatprep.subr.mxu0 0.0
  %312 = vmatpush1.xpose.msra.mxu0 0.0
  %313 = vmatprep.subr.mxu0 0.0
  %314 = vmatpush1.xpose.msra.mxu0 0.0
  %315 = vmatprep.subr.mxu0 0.0
  %316 = vmatpush1.xpose.msra.mxu0 0.0
  %317 = vmatprep.subr.mxu0 0.0
  %318 = vmatpush1.xpose.msra.mxu0 0.0
  %319 = vmatprep.subr.mxu0 0.0
  %320 = vmatpush1.xpose.msra.mxu0 0.0
  %321 = vmatprep.mubr.f32.mxu0 0.0
  %322 = vmatmul.mubr.f32.gmra.mrb[0].mxu0 %v225
  %v323 = vpop.f32.mrb[0].mxu0
  %v324 = vadd.f32 %v191, %v323
  %v325 = vpop.f32.mrb[0].mxu0
  %326 = vmatprep.mubr.f32.mxu0 0.0
  %327 = vmatmul.mubr.f32.gmra.mrb[0].mxu0 %v227
  %v328 = vpop.f32.mrb[0].mxu0
  %v329 = vadd.f32 %v192, %v328
  %v330 = vpop.f32.mrb[0].mxu0
  %331 = vmatprep.mubr.f32.mxu0 0.0
  %332 = vmatmul.mubr.f32.gmra.mrb[0].mxu0 %v229
  %v333 = vpop.f32.mrb[0].mxu0
  %v334 = vadd.f32 %v193, %v333
  %v335 = vpop.f32.mrb[0].mxu0
  %336 = vmatprep.mubr.f32.mxu0 0.0
  %337 = vmatmul.mubr.f32.gmra.mrb[0].mxu0 %v231
  %v338 = vpop.f32.mrb[0].mxu0
  %v339 = vadd.f32 %v194, %v338
  %v340 = vpop.f32.mrb[0].mxu0
  %341 = vmatprep.mubr.f32.mxu0 0.0
  %342 = vmatmul.mubr.f32.gmra.mrb[0].mxu0 %v233
  %v343 = vpop.f32.mrb[0].mxu0
  %v344 = vadd.f32 %v195, %v343
  %v345 = vpop.f32.mrb[0].mxu0
  %346 = vmatprep.mubr.f32.mxu0 0.0
  %347 = vmatmul.mubr.f32.gmra.mrb[0].mxu0 %v235
  %v348 = vpop.f32.mrb[0].mxu0
  %v349 = vadd.f32 %v196, %v348
  %v350 = vpop.f32.mrb[0].mxu0
  %351 = vmatprep.mubr.f32.mxu0 0.0
  %352 = vmatmul.mubr.f32.gmra.mrb[0].mxu0 %v237
  %v353 = vpop.f32.mrb[0].mxu0
  %v354 = vadd.f32 %v197, %v353
  %v355 = vpop.f32.mrb[0].mxu0
  %356 = vmatprep.mubr.f32.mxu0 0.0
  %357 = vmatmul.mubr.f32.gmra.mrb[0].mxu0 %v239
  %v358 = vpop.f32.mrb[0].mxu0
  %v359 = vadd.f32 %v198, %v358
  %v360 = vpop.f32.mrb[0].mxu0
  %361 = vdwg.mxu0
  %vm362 = vcmask 523264
  %v363 = vsel %vm362, %v324, -inf
  %364 = vmax.xlane.f32.xlu0 %v363
  %v365 = vpop.xlane.xlu0 %364
  %v366 = vsel %vm362, %v329, -inf
  %367 = vmax.xlane.f32.xlu0 %v366
  %v368 = vpop.xlane.xlu0 %367
  %v369 = vsel %vm362, %v334, -inf
  %370 = vmax.xlane.f32.xlu0 %v369
  %v371 = vpop.xlane.xlu0 %370
  %v372 = vsel %vm362, %v339, -inf
  %373 = vmax.xlane.f32.xlu0 %v372
  %v374 = vpop.xlane.xlu0 %373
  %v375 = vsel %vm362, %v344, -inf
  %376 = vmax.xlane.f32.xlu0 %v375
  %v377 = vpop.xlane.xlu0 %376
  %v378 = vsel %vm362, %v349, -inf
  %379 = vmax.xlane.f32.xlu0 %v378
  %v380 = vpop.xlane.xlu0 %379
  %v381 = vsel %vm362, %v354, -inf
  %382 = vmax.xlane.f32.xlu0 %v381
  %v383 = vpop.xlane.xlu0 %382
  %v384 = vsel %vm362, %v359, -inf
  %385 = vmax.xlane.f32.xlu0 %v384
  %v386 = vpop.xlane.xlu0 %385
  %v387 = vsub.f32 %v324, %v365
  %v388 = vsub.f32 %v329, %v368
  %v389 = vsub.f32 %v334, %v371
  %v390 = vsub.f32 %v339, %v374
  %v391 = vsub.f32 %v344, %v377
  %v392 = vsub.f32 %v349, %v380
  %v393 = vsub.f32 %v354, %v383
  %v394 = vsub.f32 %v359, %v386
  %v395 = vmul.f32 %v387, 1.442695
  %v396 = vpow.pop %v395
  %v397 = vmul.f32 %v388, 1.442695
  %v398 = vpow.pop %v397
  %v399 = vmul.f32 %v389, 1.442695
  %v400 = vpow.pop %v399
  %v401 = vmul.f32 %v390, 1.442695
  %v402 = vpow.pop %v401
  %v403 = vmul.f32 %v391, 1.442695
  %v404 = vpow.pop %v403
  %v405 = vmul.f32 %v392, 1.442695
  %v406 = vpow.pop %v405
  %v407 = vmul.f32 %v393, 1.442695
  %v408 = vpow.pop %v407
  %v409 = vmul.f32 %v394, 1.442695
  %v410 = vpow.pop %v409
  %v411 = vsel %vm362, %v396, 0.0
  %412 = vadd.xlane.f32.xlu0 %v411
  %v413 = vpop.xlane.xlu0 %412
  %v414 = vsel %vm362, %v398, 0.0
  %415 = vadd.xlane.f32.xlu0 %v414
  %v416 = vpop.xlane.xlu0 %415
  %v417 = vsel %vm362, %v400, 0.0
  %418 = vadd.xlane.f32.xlu0 %v417
  %v419 = vpop.xlane.xlu0 %418
  %v420 = vsel %vm362, %v402, 0.0
  %421 = vadd.xlane.f32.xlu0 %v420
  %v422 = vpop.xlane.xlu0 %421
  %v423 = vsel %vm362, %v404, 0.0
  %424 = vadd.xlane.f32.xlu0 %v423
  %v425 = vpop.xlane.xlu0 %424
  %v426 = vsel %vm362, %v406, 0.0
  %427 = vadd.xlane.f32.xlu0 %v426
  %v428 = vpop.xlane.xlu0 %427
  %v429 = vsel %vm362, %v408, 0.0
  %430 = vadd.xlane.f32.xlu0 %v429
  %v431 = vpop.xlane.xlu0 %430
  %v432 = vsel %vm362, %v410, 0.0
  %433 = vadd.xlane.f32.xlu0 %v432
  %v434 = vpop.xlane.xlu0 %433
  %v435 = vrcp.pop %v413
  %v436 = vrcp.pop %v416
  %v437 = vrcp.pop %v419
  %v438 = vrcp.pop %v422
  %v439 = vrcp.pop %v425
  %v440 = vrcp.pop %v428
  %v441 = vrcp.pop %v431
  %v442 = vrcp.pop %v434
  %v443 = vmul.f32 %v396, %v435
  %v444 = vmul.f32 %v398, %v436
  %v445 = vmul.f32 %v400, %v437
  %v446 = vmul.f32 %v402, %v438
  %v447 = vmul.f32 %v404, %v439
  %v448 = vmul.f32 %v406, %v440
  %v449 = vmul.f32 %v408, %v441
  %v450 = vmul.f32 %v410, %v442
  %451 = vrot.lane.b32.xlu0 %v125, 96
  %v452 = vpop.permute.xlu0 %451
  %453 = vrot.lane.b32.xlu0 %v130, 96
  %v454 = vpop.permute.xlu0 %453
  %455 = vrot.lane.b32.xlu0 %v135, 96
  %v456 = vpop.permute.xlu0 %455
  %457 = vrot.lane.b32.xlu0 %v140, 96
  %v458 = vpop.permute.xlu0 %457
  %459 = vrot.lane.b32.xlu0 %v145, 96
  %v460 = vpop.permute.xlu0 %459
  %461 = vrot.lane.b32.xlu0 %v150, 96
  %v462 = vpop.permute.xlu0 %461
  %463 = vrot.lane.b32.xlu0 %v155, 96
  %v464 = vpop.permute.xlu0 %463
  %465 = vrot.lane.b32.xlu0 %v160, 96
  %v466 = vpop.permute.xlu0 %465
  %v476 = vsel %vm362, %v443, 0
  %v479 = vsel %vm362, %v444, 0
  %v482 = vsel %vm362, %v445, 0
  %v485 = vsel %vm362, %v446, 0
  %v488 = vsel %vm362, %v447, 0
  %v491 = vsel %vm362, %v448, 0
  %v494 = vsel %vm362, %v449, 0
  %v497 = vsel %vm362, %v450, 0
  %499 = vmatprep.subr.mxu0 0.0
  %500 = vmatpush1.msra.mxu0 %v452
  %501 = vmatprep.subr.mxu0 0.0
  %502 = vmatpush1.msra.mxu0 %v454
  %503 = vmatprep.subr.mxu0 0.0
  %504 = vmatpush1.msra.mxu0 %v456
  %505 = vmatprep.subr.mxu0 0.0
  %506 = vmatpush1.msra.mxu0 %v458
  %507 = vmatprep.subr.mxu0 0.0
  %508 = vmatpush1.msra.mxu0 %v460
  %509 = vmatprep.subr.mxu0 0.0
  %510 = vmatpush1.msra.mxu0 %v462
  %511 = vmatprep.subr.mxu0 0.0
  %512 = vmatpush1.msra.mxu0 %v464
  %513 = vmatprep.subr.mxu0 0.0
  %514 = vmatpush1.msra.mxu0 %v466
  %515 = vmatprep.subr.mxu0 0.0
  %516 = vmatpush1.msra.mxu0 0.0
  %517 = vmatprep.subr.mxu0 0.0
  %518 = vmatpush1.msra.mxu0 0.0
  %519 = vmatprep.subr.mxu0 0.0
  %520 = vmatpush1.msra.mxu0 0.0
  %521 = vmatprep.subr.mxu0 0.0
  %522 = vmatpush1.msra.mxu0 0.0
  %523 = vmatprep.subr.mxu0 0.0
  %524 = vmatpush1.msra.mxu0 0.0
  %525 = vmatprep.subr.mxu0 0.0
  %526 = vmatpush1.msra.mxu0 0.0
  %527 = vmatprep.subr.mxu0 0.0
  %528 = vmatpush1.msra.mxu0 0.0
  %529 = vmatprep.subr.mxu0 0.0
  %530 = vmatpush1.msra.mxu0 0.0
  %531 = vmatprep.subr.mxu0 0.0
  %532 = vmatpush1.msra.mxu0 0.0
  %533 = vmatprep.subr.mxu0 0.0
  %534 = vmatpush1.msra.mxu0 0.0
  %535 = vmatprep.subr.mxu0 0.0
  %536 = vmatpush1.msra.mxu0 0.0
  %537 = vmatprep.subr.mxu0 0.0
  %538 = vmatpush1.msra.mxu0 0.0
  %539 = vmatprep.subr.mxu0 0.0
  %540 = vmatpush1.msra.mxu0 0.0
  %541 = vmatprep.subr.mxu0 0.0
  %542 = vmatpush1.msra.mxu0 0.0
  %543 = vmatprep.subr.mxu0 0.0
  %544 = vmatpush1.msra.mxu0 0.0
  %545 = vmatprep.subr.mxu0 0.0
  %546 = vmatpush1.msra.mxu0 0.0
  %547 = vmatprep.subr.mxu0 0.0
  %548 = vmatpush1.msra.mxu0 0.0
  %549 = vmatprep.subr.mxu0 0.0
  %550 = vmatpush1.msra.mxu0 0.0
  %551 = vmatprep.subr.mxu0 0.0
  %552 = vmatpush1.msra.mxu0 0.0
  %553 = vmatprep.subr.mxu0 0.0
  %554 = vmatpush1.msra.mxu0 0.0
  %555 = vmatprep.subr.mxu0 0.0
  %556 = vmatpush1.msra.mxu0 0.0
  %557 = vmatprep.subr.mxu0 0.0
  %558 = vmatpush1.msra.mxu0 0.0
  %559 = vmatprep.subr.mxu0 0.0
  %560 = vmatpush1.msra.mxu0 0.0
  %561 = vmatprep.subr.mxu0 0.0
  %562 = vmatpush1.msra.mxu0 0.0
  %563 = vmatprep.mubr.f32.mxu0 0.0
  %564 = vmatmul.mubr.f32.gmra.mrb[0].mxu0 %v476
  %v565 = vpop.f32.mrb[0].mxu0
  %v566 = vadd.f32 0.0, %v565
  %v567 = vpop.f32.mrb[0].mxu0
  %568 = vmatprep.mubr.f32.mxu0 0.0
  %569 = vmatmul.mubr.f32.gmra.mrb[0].mxu0 %v479
  %v570 = vpop.f32.mrb[0].mxu0
  %v571 = vadd.f32 0.0, %v570
  %v572 = vpop.f32.mrb[0].mxu0
  %573 = vmatprep.mubr.f32.mxu0 0.0
  %574 = vmatmul.mubr.f32.gmra.mrb[0].mxu0 %v482
  %v575 = vpop.f32.mrb[0].mxu0
  %v576 = vadd.f32 0.0, %v575
  %v577 = vpop.f32.mrb[0].mxu0
  %578 = vmatprep.mubr.f32.mxu0 0.0
  %579 = vmatmul.mubr.f32.gmra.mrb[0].mxu0 %v485
  %v580 = vpop.f32.mrb[0].mxu0
  %v581 = vadd.f32 0.0, %v580
  %v582 = vpop.f32.mrb[0].mxu0
  %583 = vmatprep.mubr.f32.mxu0 0.0
  %584 = vmatmul.mubr.f32.gmra.mrb[0].mxu0 %v488
  %v585 = vpop.f32.mrb[0].mxu0
  %v586 = vadd.f32 0.0, %v585
  %v587 = vpop.f32.mrb[0].mxu0
  %588 = vmatprep.mubr.f32.mxu0 0.0
  %589 = vmatmul.mubr.f32.gmra.mrb[0].mxu0 %v491
  %v590 = vpop.f32.mrb[0].mxu0
  %v591 = vadd.f32 0.0, %v590
  %v592 = vpop.f32.mrb[0].mxu0
  %593 = vmatprep.mubr.f32.mxu0 0.0
  %594 = vmatmul.mubr.f32.gmra.mrb[0].mxu0 %v494
  %v595 = vpop.f32.mrb[0].mxu0
  %v596 = vadd.f32 0.0, %v595
  %v597 = vpop.f32.mrb[0].mxu0
  %598 = vmatprep.mubr.f32.mxu0 0.0
  %599 = vmatmul.mubr.f32.gmra.mrb[0].mxu0 %v497
  %v600 = vpop.f32.mrb[0].mxu0
  %v601 = vadd.f32 0.0, %v600
  %v602 = vpop.f32.mrb[0].mxu0
  %603 = vdwg.mxu0
  %v604 = vlaneseq
  %v605 = vshrl.u32 %v604, 7
  %v606 = vsub.s32 0, %v605
  %v607 = vrot.slane %v199, %v606
  %v608 = vadd.f32 %v607, %v566
  %v609 = vadd.f32 %v607, %v571
  %v610 = vadd.f32 %v607, %v576
  %v611 = vadd.f32 %v607, %v581
  %v612 = vadd.f32 %v607, %v586
  %v613 = vadd.f32 %v607, %v591
  %v614 = vadd.f32 %v607, %v596
  %v615 = vadd.f32 %v607, %v601
  %616 = vrot.lane.b32.xlu0 %v125, 112
  %v617 = vpop.permute.xlu0 %616
  %618 = vrot.lane.b32.xlu0 %v130, 112
  %v619 = vpop.permute.xlu0 %618
  %620 = vrot.lane.b32.xlu0 %v135, 112
  %v621 = vpop.permute.xlu0 %620
  %622 = vrot.lane.b32.xlu0 %v140, 112
  %v623 = vpop.permute.xlu0 %622
  %624 = vrot.lane.b32.xlu0 %v145, 112
  %v625 = vpop.permute.xlu0 %624
  %626 = vrot.lane.b32.xlu0 %v150, 112
  %v627 = vpop.permute.xlu0 %626
  %628 = vrot.lane.b32.xlu0 %v155, 112
  %v629 = vpop.permute.xlu0 %628
  %630 = vrot.lane.b32.xlu0 %v160, 112
  %v631 = vpop.permute.xlu0 %630
  %632 = vrot.lane.b32.xlu0 %v125, 104
  %v633 = vpop.permute.xlu0 %632
  %634 = vrot.lane.b32.xlu0 %v130, 104
  %v635 = vpop.permute.xlu0 %634
  %636 = vrot.lane.b32.xlu0 %v135, 104
  %v637 = vpop.permute.xlu0 %636
  %638 = vrot.lane.b32.xlu0 %v140, 104
  %v639 = vpop.permute.xlu0 %638
  %640 = vrot.lane.b32.xlu0 %v145, 104
  %v641 = vpop.permute.xlu0 %640
  %642 = vrot.lane.b32.xlu0 %v150, 104
  %v643 = vpop.permute.xlu0 %642
  %644 = vrot.lane.b32.xlu0 %v155, 104
  %v645 = vpop.permute.xlu0 %644
  %646 = vrot.lane.b32.xlu0 %v160, 104
  %v647 = vpop.permute.xlu0 %646
  %v648 = vsel %vm224, %v617, 0
  %v650 = vsel %vm224, %v619, 0
  %v652 = vsel %vm224, %v621, 0
  %v654 = vsel %vm224, %v623, 0
  %v656 = vsel %vm224, %v625, 0
  %v658 = vsel %vm224, %v627, 0
  %v660 = vsel %vm224, %v629, 0
  %v662 = vsel %vm224, %v631, 0
  %v664 = vsel %vm224, %v633, 0
  %v666 = vsel %vm224, %v635, 0
  %v668 = vsel %vm224, %v637, 0
  %v670 = vsel %vm224, %v639, 0
  %v672 = vsel %vm224, %v641, 0
  %v674 = vsel %vm224, %v643, 0
  %v676 = vsel %vm224, %v645, 0
  %v678 = vsel %vm224, %v647, 0
  %680 = vmatprep.subr.mxu0 0.0
  %681 = vmatpush1.xpose.msra.mxu0 %v664
  %682 = vmatprep.subr.mxu0 0.0
  %683 = vmatpush1.xpose.msra.mxu0 %v666
  %684 = vmatprep.subr.mxu0 0.0
  %685 = vmatpush1.xpose.msra.mxu0 %v668
  %686 = vmatprep.subr.mxu0 0.0
  %687 = vmatpush1.xpose.msra.mxu0 %v670
  %688 = vmatprep.subr.mxu0 0.0
  %689 = vmatpush1.xpose.msra.mxu0 %v672
  %690 = vmatprep.subr.mxu0 0.0
  %691 = vmatpush1.xpose.msra.mxu0 %v674
  %692 = vmatprep.subr.mxu0 0.0
  %693 = vmatpush1.xpose.msra.mxu0 %v676
  %694 = vmatprep.subr.mxu0 0.0
  %695 = vmatpush1.xpose.msra.mxu0 %v678
  %696 = vmatprep.subr.mxu0 0.0
  %697 = vmatpush1.xpose.msra.mxu0 0.0
  %698 = vmatprep.subr.mxu0 0.0
  %699 = vmatpush1.xpose.msra.mxu0 0.0
  %700 = vmatprep.subr.mxu0 0.0
  %701 = vmatpush1.xpose.msra.mxu0 0.0
  %702 = vmatprep.subr.mxu0 0.0
  %703 = vmatpush1.xpose.msra.mxu0 0.0
  %704 = vmatprep.subr.mxu0 0.0
  %705 = vmatpush1.xpose.msra.mxu0 0.0
  %706 = vmatprep.subr.mxu0 0.0
  %707 = vmatpush1.xpose.msra.mxu0 0.0
  %708 = vmatprep.subr.mxu0 0.0
  %709 = vmatpush1.xpose.msra.mxu0 0.0
  %710 = vmatprep.subr.mxu0 0.0
  %711 = vmatpush1.xpose.msra.mxu0 0.0
  %712 = vmatprep.subr.mxu0 0.0
  %713 = vmatpush1.xpose.msra.mxu0 0.0
  %714 = vmatprep.subr.mxu0 0.0
  %715 = vmatpush1.xpose.msra.mxu0 0.0
  %716 = vmatprep.subr.mxu0 0.0
  %717 = vmatpush1.xpose.msra.mxu0 0.0
  %718 = vmatprep.subr.mxu0 0.0
  %719 = vmatpush1.xpose.msra.mxu0 0.0
  %720 = vmatprep.subr.mxu0 0.0
  %721 = vmatpush1.xpose.msra.mxu0 0.0
  %722 = vmatprep.subr.mxu0 0.0
  %723 = vmatpush1.xpose.msra.mxu0 0.0
  %724 = vmatprep.subr.mxu0 0.0
  %725 = vmatpush1.xpose.msra.mxu0 0.0
  %726 = vmatprep.subr.mxu0 0.0
  %727 = vmatpush1.xpose.msra.mxu0 0.0
  %728 = vmatprep.subr.mxu0 0.0
  %729 = vmatpush1.xpose.msra.mxu0 0.0
  %730 = vmatprep.subr.mxu0 0.0
  %731 = vmatpush1.xpose.msra.mxu0 0.0
  %732 = vmatprep.subr.mxu0 0.0
  %733 = vmatpush1.xpose.msra.mxu0 0.0
  %734 = vmatprep.subr.mxu0 0.0
  %735 = vmatpush1.xpose.msra.mxu0 0.0
  %736 = vmatprep.subr.mxu0 0.0
  %737 = vmatpush1.xpose.msra.mxu0 0.0
  %738 = vmatprep.subr.mxu0 0.0
  %739 = vmatpush1.xpose.msra.mxu0 0.0
  %740 = vmatprep.subr.mxu0 0.0
  %741 = vmatpush1.xpose.msra.mxu0 0.0
  %742 = vmatprep.subr.mxu0 0.0
  %743 = vmatpush1.xpose.msra.mxu0 0.0
  %744 = vmatprep.mubr.f32.mxu0 0.0
  %745 = vmatmul.mubr.f32.gmra.mrb[0].mxu0 %v648
  %v746 = vpop.f32.mrb[0].mxu0
  %v747 = vadd.f32 %v191, %v746
  %v748 = vpop.f32.mrb[0].mxu0
  %749 = vmatprep.mubr.f32.mxu0 0.0
  %750 = vmatmul.mubr.f32.gmra.mrb[0].mxu0 %v650
  %v751 = vpop.f32.mrb[0].mxu0
  %v752 = vadd.f32 %v192, %v751
  %v753 = vpop.f32.mrb[0].mxu0
  %754 = vmatprep.mubr.f32.mxu0 0.0
  %755 = vmatmul.mubr.f32.gmra.mrb[0].mxu0 %v652
  %v756 = vpop.f32.mrb[0].mxu0
  %v757 = vadd.f32 %v193, %v756
  %v758 = vpop.f32.mrb[0].mxu0
  %759 = vmatprep.mubr.f32.mxu0 0.0
  %760 = vmatmul.mubr.f32.gmra.mrb[0].mxu0 %v654
  %v761 = vpop.f32.mrb[0].mxu0
  %v762 = vadd.f32 %v194, %v761
  %v763 = vpop.f32.mrb[0].mxu0
  %764 = vmatprep.mubr.f32.mxu0 0.0
  %765 = vmatmul.mubr.f32.gmra.mrb[0].mxu0 %v656
  %v766 = vpop.f32.mrb[0].mxu0
  %v767 = vadd.f32 %v195, %v766
  %v768 = vpop.f32.mrb[0].mxu0
  %769 = vmatprep.mubr.f32.mxu0 0.0
  %770 = vmatmul.mubr.f32.gmra.mrb[0].mxu0 %v658
  %v771 = vpop.f32.mrb[0].mxu0
  %v772 = vadd.f32 %v196, %v771
  %v773 = vpop.f32.mrb[0].mxu0
  %774 = vmatprep.mubr.f32.mxu0 0.0
  %775 = vmatmul.mubr.f32.gmra.mrb[0].mxu0 %v660
  %v776 = vpop.f32.mrb[0].mxu0
  %v777 = vadd.f32 %v197, %v776
  %v778 = vpop.f32.mrb[0].mxu0
  %779 = vmatprep.mubr.f32.mxu0 0.0
  %780 = vmatmul.mubr.f32.gmra.mrb[0].mxu0 %v662
  %v781 = vpop.f32.mrb[0].mxu0
  %v782 = vadd.f32 %v198, %v781
  %v783 = vpop.f32.mrb[0].mxu0
  %784 = vdwg.mxu0
  %v785 = vsel %vm362, %v747, -inf
  %786 = vmax.xlane.f32.xlu0 %v785
  %v787 = vpop.xlane.xlu0 %786
  %v788 = vsel %vm362, %v752, -inf
  %789 = vmax.xlane.f32.xlu0 %v788
  %v790 = vpop.xlane.xlu0 %789
  %v791 = vsel %vm362, %v757, -inf
  %792 = vmax.xlane.f32.xlu0 %v791
  %v793 = vpop.xlane.xlu0 %792
  %v794 = vsel %vm362, %v762, -inf
  %795 = vmax.xlane.f32.xlu0 %v794
  %v796 = vpop.xlane.xlu0 %795
  %v797 = vsel %vm362, %v767, -inf
  %798 = vmax.xlane.f32.xlu0 %v797
  %v799 = vpop.xlane.xlu0 %798
  %v800 = vsel %vm362, %v772, -inf
  %801 = vmax.xlane.f32.xlu0 %v800
  %v802 = vpop.xlane.xlu0 %801
  %v803 = vsel %vm362, %v777, -inf
  %804 = vmax.xlane.f32.xlu0 %v803
  %v805 = vpop.xlane.xlu0 %804
  %v806 = vsel %vm362, %v782, -inf
  %807 = vmax.xlane.f32.xlu0 %v806
  %v808 = vpop.xlane.xlu0 %807
  %v809 = vsub.f32 %v747, %v787
  %v810 = vsub.f32 %v752, %v790
  %v811 = vsub.f32 %v757, %v793
  %v812 = vsub.f32 %v762, %v796
  %v813 = vsub.f32 %v767, %v799
  %v814 = vsub.f32 %v772, %v802
  %v815 = vsub.f32 %v777, %v805
  %v816 = vsub.f32 %v782, %v808
  %v817 = vmul.f32 %v809, 1.442695
  %v818 = vpow.pop %v817
  %v819 = vmul.f32 %v810, 1.442695
  %v820 = vpow.pop %v819
  %v821 = vmul.f32 %v811, 1.442695
  %v822 = vpow.pop %v821
  %v823 = vmul.f32 %v812, 1.442695
  %v824 = vpow.pop %v823
  %v825 = vmul.f32 %v813, 1.442695
  %v826 = vpow.pop %v825
  %v827 = vmul.f32 %v814, 1.442695
  %v828 = vpow.pop %v827
  %v829 = vmul.f32 %v815, 1.442695
  %v830 = vpow.pop %v829
  %v831 = vmul.f32 %v816, 1.442695
  %v832 = vpow.pop %v831
  %v833 = vsel %vm362, %v818, 0.0
  %834 = vadd.xlane.f32.xlu0 %v833
  %v835 = vpop.xlane.xlu0 %834
  %v836 = vsel %vm362, %v820, 0.0
  %837 = vadd.xlane.f32.xlu0 %v836
  %v838 = vpop.xlane.xlu0 %837
  %v839 = vsel %vm362, %v822, 0.0
  %840 = vadd.xlane.f32.xlu0 %v839
  %v841 = vpop.xlane.xlu0 %840
  %v842 = vsel %vm362, %v824, 0.0
  %843 = vadd.xlane.f32.xlu0 %v842
  %v844 = vpop.xlane.xlu0 %843
  %v845 = vsel %vm362, %v826, 0.0
  %846 = vadd.xlane.f32.xlu0 %v845
  %v847 = vpop.xlane.xlu0 %846
  %v848 = vsel %vm362, %v828, 0.0
  %849 = vadd.xlane.f32.xlu0 %v848
  %v850 = vpop.xlane.xlu0 %849
  %v851 = vsel %vm362, %v830, 0.0
  %852 = vadd.xlane.f32.xlu0 %v851
  %v853 = vpop.xlane.xlu0 %852
  %v854 = vsel %vm362, %v832, 0.0
  %855 = vadd.xlane.f32.xlu0 %v854
  %v856 = vpop.xlane.xlu0 %855
  %v857 = vrcp.pop %v835
  %v858 = vrcp.pop %v838
  %v859 = vrcp.pop %v841
  %v860 = vrcp.pop %v844
  %v861 = vrcp.pop %v847
  %v862 = vrcp.pop %v850
  %v863 = vrcp.pop %v853
  %v864 = vrcp.pop %v856
  %v865 = vmul.f32 %v818, %v857
  %v866 = vmul.f32 %v820, %v858
  %v867 = vmul.f32 %v822, %v859
  %v868 = vmul.f32 %v824, %v860
  %v869 = vmul.f32 %v826, %v861
  %v870 = vmul.f32 %v828, %v862
  %v871 = vmul.f32 %v830, %v863
  %v872 = vmul.f32 %v832, %v864
  %873 = vrot.lane.b32.xlu0 %v125, 80
  %v874 = vpop.permute.xlu0 %873
  %875 = vrot.lane.b32.xlu0 %v130, 80
  %v876 = vpop.permute.xlu0 %875
  %877 = vrot.lane.b32.xlu0 %v135, 80
  %v878 = vpop.permute.xlu0 %877
  %879 = vrot.lane.b32.xlu0 %v140, 80
  %v880 = vpop.permute.xlu0 %879
  %881 = vrot.lane.b32.xlu0 %v145, 80
  %v882 = vpop.permute.xlu0 %881
  %883 = vrot.lane.b32.xlu0 %v150, 80
  %v884 = vpop.permute.xlu0 %883
  %885 = vrot.lane.b32.xlu0 %v155, 80
  %v886 = vpop.permute.xlu0 %885
  %887 = vrot.lane.b32.xlu0 %v160, 80
  %v888 = vpop.permute.xlu0 %887
  %v898 = vsel %vm362, %v865, 0
  %v901 = vsel %vm362, %v866, 0
  %v904 = vsel %vm362, %v867, 0
  %v907 = vsel %vm362, %v868, 0
  %v910 = vsel %vm362, %v869, 0
  %v913 = vsel %vm362, %v870, 0
  %v916 = vsel %vm362, %v871, 0
  %v919 = vsel %vm362, %v872, 0
  %921 = vmatprep.subr.mxu0 0.0
  %922 = vmatpush1.msra.mxu0 %v874
  %923 = vmatprep.subr.mxu0 0.0
  %924 = vmatpush1.msra.mxu0 %v876
  %925 = vmatprep.subr.mxu0 0.0
  %926 = vmatpush1.msra.mxu0 %v878
  %927 = vmatprep.subr.mxu0 0.0
  %928 = vmatpush1.msra.mxu0 %v880
  %929 = vmatprep.subr.mxu0 0.0
  %930 = vmatpush1.msra.mxu0 %v882
  %931 = vmatprep.subr.mxu0 0.0
  %932 = vmatpush1.msra.mxu0 %v884
  %933 = vmatprep.subr.mxu0 0.0
  %934 = vmatpush1.msra.mxu0 %v886
  %935 = vmatprep.subr.mxu0 0.0
  %936 = vmatpush1.msra.mxu0 %v888
  %937 = vmatprep.subr.mxu0 0.0
  %938 = vmatpush1.msra.mxu0 0.0
  %939 = vmatprep.subr.mxu0 0.0
  %940 = vmatpush1.msra.mxu0 0.0
  %941 = vmatprep.subr.mxu0 0.0
  %942 = vmatpush1.msra.mxu0 0.0
  %943 = vmatprep.subr.mxu0 0.0
  %944 = vmatpush1.msra.mxu0 0.0
  %945 = vmatprep.subr.mxu0 0.0
  %946 = vmatpush1.msra.mxu0 0.0
  %947 = vmatprep.subr.mxu0 0.0
  %948 = vmatpush1.msra.mxu0 0.0
  %949 = vmatprep.subr.mxu0 0.0
  %950 = vmatpush1.msra.mxu0 0.0
  %951 = vmatprep.subr.mxu0 0.0
  %952 = vmatpush1.msra.mxu0 0.0
  %953 = vmatprep.subr.mxu0 0.0
  %954 = vmatpush1.msra.mxu0 0.0
  %955 = vmatprep.subr.mxu0 0.0
  %956 = vmatpush1.msra.mxu0 0.0
  %957 = vmatprep.subr.mxu0 0.0
  %958 = vmatpush1.msra.mxu0 0.0
  %959 = vmatprep.subr.mxu0 0.0
  %960 = vmatpush1.msra.mxu0 0.0
  %961 = vmatprep.subr.mxu0 0.0
  %962 = vmatpush1.msra.mxu0 0.0
  %963 = vmatprep.subr.mxu0 0.0
  %964 = vmatpush1.msra.mxu0 0.0
  %965 = vmatprep.subr.mxu0 0.0
  %966 = vmatpush1.msra.mxu0 0.0
  %967 = vmatprep.subr.mxu0 0.0
  %968 = vmatpush1.msra.mxu0 0.0
  %969 = vmatprep.subr.mxu0 0.0
  %970 = vmatpush1.msra.mxu0 0.0
  %971 = vmatprep.subr.mxu0 0.0
  %972 = vmatpush1.msra.mxu0 0.0
  %973 = vmatprep.subr.mxu0 0.0
  %974 = vmatpush1.msra.mxu0 0.0
  %975 = vmatprep.subr.mxu0 0.0
  %976 = vmatpush1.msra.mxu0 0.0
  %977 = vmatprep.subr.mxu0 0.0
  %978 = vmatpush1.msra.mxu0 0.0
  %979 = vmatprep.subr.mxu0 0.0
  %980 = vmatpush1.msra.mxu0 0.0
  %981 = vmatprep.subr.mxu0 0.0
  %982 = vmatpush1.msra.mxu0 0.0
  %983 = vmatprep.subr.mxu0 0.0
  %984 = vmatpush1.msra.mxu0 0.0
  %985 = vmatprep.mubr.f32.mxu0 0.0
  %986 = vmatmul.mubr.f32.gmra.mrb[0].mxu0 %v898
  %v987 = vpop.f32.mrb[0].mxu0
  %v988 = vadd.f32 0.0, %v987
  %v989 = vpop.f32.mrb[0].mxu0
  %990 = vmatprep.mubr.f32.mxu0 0.0
  %991 = vmatmul.mubr.f32.gmra.mrb[0].mxu0 %v901
  %v992 = vpop.f32.mrb[0].mxu0
  %v993 = vadd.f32 0.0, %v992
  %v994 = vpop.f32.mrb[0].mxu0
  %995 = vmatprep.mubr.f32.mxu0 0.0
  %996 = vmatmul.mubr.f32.gmra.mrb[0].mxu0 %v904
  %v997 = vpop.f32.mrb[0].mxu0
  %v998 = vadd.f32 0.0, %v997
  %v999 = vpop.f32.mrb[0].mxu0
  %1000 = vmatprep.mubr.f32.mxu0 0.0
  %1001 = vmatmul.mubr.f32.gmra.mrb[0].mxu0 %v907
  %v1002 = vpop.f32.mrb[0].mxu0
  %v1003 = vadd.f32 0.0, %v1002
  %v1004 = vpop.f32.mrb[0].mxu0
  %1005 = vmatprep.mubr.f32.mxu0 0.0
  %1006 = vmatmul.mubr.f32.gmra.mrb[0].mxu0 %v910
  %v1007 = vpop.f32.mrb[0].mxu0
  %v1008 = vadd.f32 0.0, %v1007
  %v1009 = vpop.f32.mrb[0].mxu0
  %1010 = vmatprep.mubr.f32.mxu0 0.0
  %1011 = vmatmul.mubr.f32.gmra.mrb[0].mxu0 %v913
  %v1012 = vpop.f32.mrb[0].mxu0
  %v1013 = vadd.f32 0.0, %v1012
  %v1014 = vpop.f32.mrb[0].mxu0
  %1015 = vmatprep.mubr.f32.mxu0 0.0
  %1016 = vmatmul.mubr.f32.gmra.mrb[0].mxu0 %v916
  %v1017 = vpop.f32.mrb[0].mxu0
  %v1018 = vadd.f32 0.0, %v1017
  %v1019 = vpop.f32.mrb[0].mxu0
  %1020 = vmatprep.mubr.f32.mxu0 0.0
  %1021 = vmatmul.mubr.f32.gmra.mrb[0].mxu0 %v919
  %v1022 = vpop.f32.mrb[0].mxu0
  %v1023 = vadd.f32 0.0, %v1022
  %v1024 = vpop.f32.mrb[0].mxu0
  %1025 = vdwg.mxu0
  %v1026 = vadd.f32 %v608, %v988
  %v1027 = vadd.f32 %v609, %v993
  %v1028 = vadd.f32 %v610, %v998
  %v1029 = vadd.f32 %v611, %v1003
  %v1030 = vadd.f32 %v612, %v1008
  %v1031 = vadd.f32 %v613, %v1013
  %v1032 = vadd.f32 %v614, %v1018
  %v1033 = vadd.f32 %v615, %v1023
  %v1034 = vadd.f32 %v17, %v1026
  %v1035 = vadd.f32 %v18, %v1027
  %v1036 = vadd.f32 %v19, %v1028
  %v1037 = vadd.f32 %v20, %v1029
  %v1038 = vadd.f32 %v21, %v1030
  %v1039 = vadd.f32 %v22, %v1031
  %v1040 = vadd.f32 %v23, %v1032
  %v1041 = vadd.f32 %v24, %v1033
  %v1042 = vld [vmem:[%s3 + $0x2] sm:$0x1]
  %v1043 = vld [vmem:[%s3 + $0x3] sm:$0x1]
  %v1044 = vsel %vm33, %v1034, 0.0
  %1045 = vadd.xlane.f32.xlu0 %v1044
  %v1046 = vpop.xlane.xlu0 %1045
  %v1047 = vsel %vm33, %v1035, 0.0
  %1048 = vadd.xlane.f32.xlu0 %v1047
  %v1049 = vpop.xlane.xlu0 %1048
  %v1050 = vsel %vm33, %v1036, 0.0
  %1051 = vadd.xlane.f32.xlu0 %v1050
  %v1052 = vpop.xlane.xlu0 %1051
  %v1053 = vsel %vm33, %v1037, 0.0
  %1054 = vadd.xlane.f32.xlu0 %v1053
  %v1055 = vpop.xlane.xlu0 %1054
  %v1056 = vsel %vm33, %v1038, 0.0
  %1057 = vadd.xlane.f32.xlu0 %v1056
  %v1058 = vpop.xlane.xlu0 %1057
  %v1059 = vsel %vm33, %v1039, 0.0
  %1060 = vadd.xlane.f32.xlu0 %v1059
  %v1061 = vpop.xlane.xlu0 %1060
  %v1062 = vsel %vm33, %v1040, 0.0
  %1063 = vadd.xlane.f32.xlu0 %v1062
  %v1064 = vpop.xlane.xlu0 %1063
  %v1065 = vsel %vm33, %v1041, 0.0
  %1066 = vadd.xlane.f32.xlu0 %v1065
  %v1067 = vpop.xlane.xlu0 %1066
  %v1068 = vrcp.pop 16.0
  %v1069 = vmul.f32 %v1046, %v1068
  %v1070 = vmul.f32 %v1049, %v1068
  %v1071 = vmul.f32 %v1052, %v1068
  %v1072 = vmul.f32 %v1055, %v1068
  %v1073 = vmul.f32 %v1058, %v1068
  %v1074 = vmul.f32 %v1061, %v1068
  %v1075 = vmul.f32 %v1064, %v1068
  %v1076 = vmul.f32 %v1067, %v1068
  %v1077 = vsub.f32 %v1034, %v1069
  %v1078 = vsub.f32 %v1035, %v1070
  %v1079 = vsub.f32 %v1036, %v1071
  %v1080 = vsub.f32 %v1037, %v1072
  %v1081 = vsub.f32 %v1038, %v1073
  %v1082 = vsub.f32 %v1039, %v1074
  %v1083 = vsub.f32 %v1040, %v1075
  %v1084 = vsub.f32 %v1041, %v1076
  %v1085 = vmul.f32 %v1077, %v1077
  %v1086 = vmul.f32 %v1078, %v1078
  %v1087 = vmul.f32 %v1079, %v1079
  %v1088 = vmul.f32 %v1080, %v1080
  %v1089 = vmul.f32 %v1081, %v1081
  %v1090 = vmul.f32 %v1082, %v1082
  %v1091 = vmul.f32 %v1083, %v1083
  %v1092 = vmul.f32 %v1084, %v1084
  %v1093 = vsel %vm33, %v1085, 0.0
  %1094 = vadd.xlane.f32.xlu0 %v1093
  %v1095 = vpop.xlane.xlu0 %1094
  %v1096 = vsel %vm33, %v1086, 0.0
  %1097 = vadd.xlane.f32.xlu0 %v1096
  %v1098 = vpop.xlane.xlu0 %1097
  %v1099 = vsel %vm33, %v1087, 0.0
  %1100 = vadd.xlane.f32.xlu0 %v1099
  %v1101 = vpop.xlane.xlu0 %1100
  %v1102 = vsel %vm33, %v1088, 0.0
  %1103 = vadd.xlane.f32.xlu0 %v1102
  %v1104 = vpop.xlane.xlu0 %1103
  %v1105 = vsel %vm33, %v1089, 0.0
  %1106 = vadd.xlane.f32.xlu0 %v1105
  %v1107 = vpop.xlane.xlu0 %1106
  %v1108 = vsel %vm33, %v1090, 0.0
  %1109 = vadd.xlane.f32.xlu0 %v1108
  %v1110 = vpop.xlane.xlu0 %1109
  %v1111 = vsel %vm33, %v1091, 0.0
  %1112 = vadd.xlane.f32.xlu0 %v1111
  %v1113 = vpop.xlane.xlu0 %1112
  %v1114 = vsel %vm33, %v1092, 0.0
  %1115 = vadd.xlane.f32.xlu0 %v1114
  %v1116 = vpop.xlane.xlu0 %1115
  %v1117 = vmul.f32 %v1095, %v1068
  %v1118 = vmul.f32 %v1098, %v1068
  %v1119 = vmul.f32 %v1101, %v1068
  %v1120 = vmul.f32 %v1104, %v1068
  %v1121 = vmul.f32 %v1107, %v1068
  %v1122 = vmul.f32 %v1110, %v1068
  %v1123 = vmul.f32 %v1113, %v1068
  %v1124 = vmul.f32 %v1116, %v1068
  %v1125 = vadd.f32 %v1117, 1e-05
  %v1126 = vadd.f32 %v1118, 1e-05
  %v1127 = vadd.f32 %v1119, 1e-05
  %v1128 = vadd.f32 %v1120, 1e-05
  %v1129 = vadd.f32 %v1121, 1e-05
  %v1130 = vadd.f32 %v1122, 1e-05
  %v1131 = vadd.f32 %v1123, 1e-05
  %v1132 = vadd.f32 %v1124, 1e-05
  %v1133 = vrsqrt.pop %v1125
  %v1134 = vrsqrt.pop %v1126
  %v1135 = vrsqrt.pop %v1127
  %v1136 = vrsqrt.pop %v1128
  %v1137 = vrsqrt.pop %v1129
  %v1138 = vrsqrt.pop %v1130
  %v1139 = vrsqrt.pop %v1131
  %v1140 = vrsqrt.pop %v1132
  %v1141 = vmul.f32 %v1077, %v1133
  %v1142 = vmul.f32 %v1078, %v1134
  %v1143 = vmul.f32 %v1079, %v1135
  %v1144 = vmul.f32 %v1080, %v1136
  %v1145 = vmul.f32 %v1081, %v1137
  %v1146 = vmul.f32 %v1082, %v1138
  %v1147 = vmul.f32 %v1083, %v1139
  %v1148 = vmul.f32 %v1084, %v1140
  %v1149 = vlaneseq
  %v1150 = vshrl.u32 %v1149, 7
  %v1151 = vsub.s32 0, %v1150
  %v1152 = vrot.slane %v1042, %v1151
  %v1153 = vmul.f32 %v1141, %v1152
  %v1154 = vmul.f32 %v1142, %v1152
  %v1155 = vmul.f32 %v1143, %v1152
  %v1156 = vmul.f32 %v1144, %v1152
  %v1157 = vmul.f32 %v1145, %v1152
  %v1158 = vmul.f32 %v1146, %v1152
  %v1159 = vmul.f32 %v1147, %v1152
  %v1160 = vmul.f32 %v1148, %v1152
  %v1161 = vlaneseq
  %v1162 = vshrl.u32 %v1161, 7
  %v1163 = vsub.s32 0, %v1162
  %v1164 = vrot.slane %v1043, %v1163
  %v1165 = vadd.f32 %v1153, %v1164
  %v1166 = vadd.f32 %v1154, %v1164
  %v1167 = vadd.f32 %v1155, %v1164
  %v1168 = vadd.f32 %v1156, %v1164
  %v1169 = vadd.f32 %v1157, %v1164
  %v1170 = vadd.f32 %v1158, %v1164
  %v1171 = vadd.f32 %v1159, %v1164
  %v1172 = vadd.f32 %v1160, %v1164
  %1174 = vrot.lane.b32.xlu0 %v1166, 16
  %v1175 = vpop.permute.xlu0 %1174
  %1178 = vrot.lane.b32.xlu0 %v1167, 32
  %v1179 = vpop.permute.xlu0 %1178
  %1182 = vrot.lane.b32.xlu0 %v1168, 48
  %v1183 = vpop.permute.xlu0 %1182
  %1186 = vrot.lane.b32.xlu0 %v1169, 64
  %v1187 = vpop.permute.xlu0 %1186
  %1190 = vrot.lane.b32.xlu0 %v1170, 80
  %v1191 = vpop.permute.xlu0 %1190
  %1194 = vrot.lane.b32.xlu0 %v1171, 96
  %v1195 = vpop.permute.xlu0 %1194
  %1198 = vrot.lane.b32.xlu0 %v1172, 112
  %v1199 = vpop.permute.xlu0 %1198
  %v1201 = vsel %vm33, %v1165, %v1175
  %vm1202 = vcmask 261120
  %v1203 = vsel %vm1202, %v1201, %v1179
  %vm1204 = vcmask 392192
  %v1205 = vsel %vm1204, %v1203, %v1183
  %v1206 = vsel %vm362, %v1205, %v1187
  %vm1207 = vcmask 654336
  %v1208 = vsel %vm1207, %v1206, %v1191
  %vm1209 = vcmask 785408
  %v1210 = vsel %vm1209, %v1208, %v1195
  %vm1211 = vcmask 916480
  %v1212 = vsel %vm1211, %v1210, %v1199
  %v1213 = vld [vmem:[%s2 + $0x10] sm:$0xff]
  %v1214 = vld [vmem:[%s2 + $0x18] sm:$0xff]
  %v1215 = vld [vmem:[%s2 + $0x20] sm:$0xff]
  %v1216 = vld [vmem:[%s2 + $0x28] sm:$0xff]
  %v1217 = vld [vmem:[%s2 + $0x30] sm:$0xff]
  %v1218 = vld [vmem:[%s2 + $0x38] sm:$0xff]
  %v1219 = vld [vmem:[%s2 + $0x40] sm:$0xff]
  %v1220 = vld [vmem:[%s2 + $0x48] sm:$0xff]
  %v1221 = vld [vmem:[%s2 + $0x50] sm:$0xff]
  %v1222 = vld [vmem:[%s2 + $0x58] sm:$0xff]
  %v1223 = vld [vmem:[%s2 + $0x60] sm:$0xff]
  %v1224 = vld [vmem:[%s2 + $0x68] sm:$0xff]
  %v1225 = vld [vmem:[%s2 + $0x70] sm:$0xff]
  %v1226 = vld [vmem:[%s2 + $0x78] sm:$0xff]
  %v1227 = vld [vmem:[%s2 + $0x80] sm:$0xff]
  %v1228 = vld [vmem:[%s2 + $0x88] sm:$0xff]
  %v1229 = vld [vmem:[%s3 + $0x4] sm:$0x1]
  %v1230 = vlaneseq
  %v1231 = vshrl.u32 %v1230, 7
  %v1232 = vsub.s32 0, %v1231
  %v1233 = vrot.slane %v1229, %v1232
  %1234 = vmatprep.subr.mxu0 0.0
  %1235 = vmatpush1.msra.mxu0 %v1213
  %1236 = vmatprep.subr.mxu0 0.0
  %1237 = vmatpush1.msra.mxu0 %v1214
  %1238 = vmatprep.subr.mxu0 0.0
  %1239 = vmatpush1.msra.mxu0 %v1215
  %1240 = vmatprep.subr.mxu0 0.0
  %1241 = vmatpush1.msra.mxu0 %v1216
  %1242 = vmatprep.subr.mxu0 0.0
  %1243 = vmatpush1.msra.mxu0 %v1217
  %1244 = vmatprep.subr.mxu0 0.0
  %1245 = vmatpush1.msra.mxu0 %v1218
  %1246 = vmatprep.subr.mxu0 0.0
  %1247 = vmatpush1.msra.mxu0 %v1219
  %1248 = vmatprep.subr.mxu0 0.0
  %1249 = vmatpush1.msra.mxu0 %v1220
  %1250 = vmatprep.subr.mxu0 0.0
  %1251 = vmatpush1.msra.mxu0 %v1221
  %1252 = vmatprep.subr.mxu0 0.0
  %1253 = vmatpush1.msra.mxu0 %v1222
  %1254 = vmatprep.subr.mxu0 0.0
  %1255 = vmatpush1.msra.mxu0 %v1223
  %1256 = vmatprep.subr.mxu0 0.0
  %1257 = vmatpush1.msra.mxu0 %v1224
  %1258 = vmatprep.subr.mxu0 0.0
  %1259 = vmatpush1.msra.mxu0 %v1225
  %1260 = vmatprep.subr.mxu0 0.0
  %1261 = vmatpush1.msra.mxu0 %v1226
  %1262 = vmatprep.subr.mxu0 0.0
  %1263 = vmatpush1.msra.mxu0 %v1227
  %1264 = vmatprep.subr.mxu0 0.0
  %1265 = vmatpush1.msra.mxu0 %v1228
  %1266 = vmatprep.subr.mxu0 0.0
  %1267 = vmatpush1.msra.mxu0 0.0
  %1268 = vmatprep.subr.mxu0 0.0
  %1269 = vmatpush1.msra.mxu0 0.0
  %1270 = vmatprep.subr.mxu0 0.0
  %1271 = vmatpush1.msra.mxu0 0.0
  %1272 = vmatprep.subr.mxu0 0.0
  %1273 = vmatpush1.msra.mxu0 0.0
  %1274 = vmatprep.subr.mxu0 0.0
  %1275 = vmatpush1.msra.mxu0 0.0
  %1276 = vmatprep.subr.mxu0 0.0
  %1277 = vmatpush1.msra.mxu0 0.0
  %1278 = vmatprep.subr.mxu0 0.0
  %1279 = vmatpush1.msra.mxu0 0.0
  %1280 = vmatprep.subr.mxu0 0.0
  %1281 = vmatpush1.msra.mxu0 0.0
  %1282 = vmatprep.subr.mxu0 0.0
  %1283 = vmatpush1.msra.mxu0 0.0
  %1284 = vmatprep.subr.mxu0 0.0
  %1285 = vmatpush1.msra.mxu0 0.0
  %1286 = vmatprep.subr.mxu0 0.0
  %1287 = vmatpush1.msra.mxu0 0.0
  %1288 = vmatprep.subr.mxu0 0.0
  %1289 = vmatpush1.msra.mxu0 0.0
  %1290 = vmatprep.subr.mxu0 0.0
  %1291 = vmatpush1.msra.mxu0 0.0
  %1292 = vmatprep.subr.mxu0 0.0
  %1293 = vmatpush1.msra.mxu0 0.0
  %1294 = vmatprep.subr.mxu0 0.0
  %1295 = vmatpush1.msra.mxu0 0.0
  %1296 = vmatprep.subr.mxu0 0.0
  %1297 = vmatpush1.msra.mxu0 0.0
  %1298 = vmatprep.mubr.f32.mxu0 0.0
  %1299 = vmatmul.mubr.f32.gmra.mrb[0].mxu0 %v1212
  %v1300 = vpop.f32.mrb[0].mxu0
  %v1301 = vadd.f32 %v1233, %v1300
  %v1302 = vpop.f32.mrb[0].mxu0
  %1303 = vdwg.mxu0
  %v1304 = vld [vmem:[%s3 + $0x5] sm:$0x1]
  %v1305 = vld [vmem:[%s3 + $0x6] sm:$0x1]
  %v1306 = vsel %vm362, %v1301, 0.0
  %1307 = vadd.xlane.f32.xlu0 %v1306
  %v1308 = vpop.xlane.xlu0 %1307
  %v1309 = vrcp.pop 64.0
  %v1310 = vmul.f32 %v1308, %v1309
  %v1311 = vsub.f32 %v1301, %v1310
  %v1312 = vmul.f32 %v1311, %v1311
  %v1313 = vsel %vm362, %v1312, 0.0
  %1314 = vadd.xlane.f32.xlu0 %v1313
  %v1315 = vpop.xlane.xlu0 %1314
  %v1316 = vmul.f32 %v1315, %v1309
  %v1317 = vadd.f32 %v1316, 1e-05
  %v1318 = vrsqrt.pop %v1317
  %v1319 = vmul.f32 %v1311, %v1318
  %v1320 = vlaneseq
  %v1321 = vshrl.u32 %v1320, 7
  %v1322 = vsub.s32 0, %v1321
  %v1323 = vrot.slane %v1304, %v1322
  %v1324 = vmul.f32 %v1319, %v1323
  %v1325 = vlaneseq
  %v1326 = vshrl.u32 %v1325, 7
  %v1327 = vsub.s32 0, %v1326
  %v1328 = vrot.slane %v1305, %v1327
  %v1329 = vadd.f32 %v1324, %v1328
  %v1330 = vmax.f32 %v1329, 0.0
  %1332 = vrot.lane.b32.xlu0 %v25, 64
  %v1333 = vpop.permute.xlu0 %1332
  %v1335 = vsel %vm362, %v1330, %v1333
  %v1336 = vld [vmem:[%s2 + $0x10] sm:$0xff]
  %v1337 = vld [vmem:[%s2 + $0x18] sm:$0xff]
  %v1338 = vld [vmem:[%s2 + $0x20] sm:$0xff]
  %v1339 = vld [vmem:[%s2 + $0x28] sm:$0xff]
  %v1340 = vld [vmem:[%s2 + $0x30] sm:$0xff]
  %v1341 = vld [vmem:[%s2 + $0x38] sm:$0xff]
  %v1342 = vld [vmem:[%s2 + $0x40] sm:$0xff]
  %v1343 = vld [vmem:[%s2 + $0x48] sm:$0xff]
  %v1344 = vld [vmem:[%s2 + $0x50] sm:$0xff]
  %vm1345 = vcmask 588800
  %v1347 = vsel %vm1345, %v1335, 0
  %1349 = vmatprep.subr.mxu0 0.0
  %1350 = vmatpush1.msra.mxu0 %v1336
  %1351 = vmatprep.subr.mxu0 0.0
  %1352 = vmatpush1.msra.mxu0 %v1337
  %1353 = vmatprep.subr.mxu0 0.0
  %1354 = vmatpush1.msra.mxu0 %v1338
  %1355 = vmatprep.subr.mxu0 0.0
  %1356 = vmatpush1.msra.mxu0 %v1339
  %1357 = vmatprep.subr.mxu0 0.0
  %1358 = vmatpush1.msra.mxu0 %v1340
  %1359 = vmatprep.subr.mxu0 0.0
  %1360 = vmatpush1.msra.mxu0 %v1341
  %1361 = vmatprep.subr.mxu0 0.0
  %1362 = vmatpush1.msra.mxu0 %v1342
  %1363 = vmatprep.subr.mxu0 0.0
  %1364 = vmatpush1.msra.mxu0 %v1343
  %1365 = vmatprep.subr.mxu0 0.0
  %1366 = vmatpush1.msra.mxu0 %v1344
  %1367 = vmatprep.subr.mxu0 0.0
  %1368 = vmatpush1.msra.mxu0 0.0
  %1369 = vmatprep.subr.mxu0 0.0
  %1370 = vmatpush1.msra.mxu0 0.0
  %1371 = vmatprep.subr.mxu0 0.0
  %1372 = vmatpush1.msra.mxu0 0.0
  %1373 = vmatprep.subr.mxu0 0.0
  %1374 = vmatpush1.msra.mxu0 0.0
  %1375 = vmatprep.subr.mxu0 0.0
  %1376 = vmatpush1.msra.mxu0 0.0
  %1377 = vmatprep.subr.mxu0 0.0
  %1378 = vmatpush1.msra.mxu0 0.0
  %1379 = vmatprep.subr.mxu0 0.0
  %1380 = vmatpush1.msra.mxu0 0.0
  %1381 = vmatprep.subr.mxu0 0.0
  %1382 = vmatpush1.msra.mxu0 0.0
  %1383 = vmatprep.subr.mxu0 0.0
  %1384 = vmatpush1.msra.mxu0 0.0
  %1385 = vmatprep.subr.mxu0 0.0
  %1386 = vmatpush1.msra.mxu0 0.0
  %1387 = vmatprep.subr.mxu0 0.0
  %1388 = vmatpush1.msra.mxu0 0.0
  %1389 = vmatprep.subr.mxu0 0.0
  %1390 = vmatpush1.msra.mxu0 0.0
  %1391 = vmatprep.subr.mxu0 0.0
  %1392 = vmatpush1.msra.mxu0 0.0
  %1393 = vmatprep.subr.mxu0 0.0
  %1394 = vmatpush1.msra.mxu0 0.0
  %1395 = vmatprep.subr.mxu0 0.0
  %1396 = vmatpush1.msra.mxu0 0.0
  %1397 = vmatprep.subr.mxu0 0.0
  %1398 = vmatpush1.msra.mxu0 0.0
  %1399 = vmatprep.subr.mxu0 0.0
  %1400 = vmatpush1.msra.mxu0 0.0
  %1401 = vmatprep.subr.mxu0 0.0
  %1402 = vmatpush1.msra.mxu0 0.0
  %1403 = vmatprep.subr.mxu0 0.0
  %1404 = vmatpush1.msra.mxu0 0.0
  %1405 = vmatprep.subr.mxu0 0.0
  %1406 = vmatpush1.msra.mxu0 0.0
  %1407 = vmatprep.subr.mxu0 0.0
  %1408 = vmatpush1.msra.mxu0 0.0
  %1409 = vmatprep.subr.mxu0 0.0
  %1410 = vmatpush1.msra.mxu0 0.0
  %1411 = vmatprep.subr.mxu0 0.0
  %1412 = vmatpush1.msra.mxu0 0.0
  %1413 = vmatprep.mubr.f32.mxu0 0.0
  %1414 = vmatmul.mubr.f32.gmra.mrb[0].mxu0 %v1347
  %v1415 = vpop.f32.mrb[0].mxu0
  %v1416 = vadd.f32 0.0, %v1415
  %v1417 = vpop.f32.mrb[0].mxu0
  %1418 = vdwg.mxu0
  %v1419 = vld [vmem:[%s3 + $0x7] sm:$0x1]
  %v1420 = vlaneseq
  %v1421 = vshrl.u32 %v1420, 7
  %v1422 = vsub.s32 0, %v1421
  %v1423 = vrot.slane %v1419, %v1422
  %1425 = vrot.lane.b32.xlu0 %v1423, 64
  %v1426 = vpop.permute.xlu0 %1425
  %v1428 = vadd.f32 %v1416, %v1426
  %v1429 = vld [vmem:[%s3 + $0x8] sm:$0x1]
  %v1430 = vld [vmem:[%s3 + $0x9] sm:$0x1]
  %1432 = vrot.lane.b32.xlu0 %v1428, 64
  %v1433 = vpop.permute.xlu0 %1432
  %v1435 = vsel %vm362, %v1433, 0.0
  %1436 = vadd.xlane.f32.xlu0 %v1435
  %v1437 = vpop.xlane.xlu0 %1436
  %v1438 = vmul.f32 %v1437, %v1309
  %v1439 = vsub.f32 %v1428, %v1438
  %v1440 = vmul.f32 %v1439, %v1439
  %1442 = vrot.lane.b32.xlu0 %v1440, 64
  %v1443 = vpop.permute.xlu0 %1442
  %v1445 = vsel %vm362, %v1443, 0.0
  %1446 = vadd.xlane.f32.xlu0 %v1445
  %v1447 = vpop.xlane.xlu0 %1446
  %v1448 = vmul.f32 %v1447, %v1309
  %v1449 = vadd.f32 %v1448, 1e-05
  %v1450 = vrsqrt.pop %v1449
  %v1451 = vmul.f32 %v1439, %v1450
  %v1452 = vlaneseq
  %v1453 = vshrl.u32 %v1452, 7
  %v1454 = vsub.s32 0, %v1453
  %v1455 = vrot.slane %v1429, %v1454
  %1457 = vrot.lane.b32.xlu0 %v1455, 64
  %v1458 = vpop.permute.xlu0 %1457
  %v1460 = vmul.f32 %v1451, %v1458
  %v1461 = vlaneseq
  %v1462 = vshrl.u32 %v1461, 7
  %v1463 = vsub.s32 0, %v1462
  %v1464 = vrot.slane %v1430, %v1463
  %1466 = vrot.lane.b32.xlu0 %v1464, 64
  %v1467 = vpop.permute.xlu0 %1466
  %v1469 = vadd.f32 %v1460, %v1467
  %v1470 = vmax.f32 %v1469, 0.0
  %v1471 = vld [vmem:[%s3 + $0xa] sm:$0x1]
  %v1472 = vlaneseq
  %v1473 = vshrl.u32 %v1472, 7
  %v1474 = vsub.s32 0, %v1473
  %v1475 = vrot.slane %v1471, %v1474
  %1477 = vrot.lane.b32.xlu0 %v1475, 64
  %v1478 = vpop.permute.xlu0 %1477
  %v1480 = vmul.f32 %v1470, %v1478
  %1482 = vrot.lane.b32.xlu0 %v1480, 64
  %v1483 = vpop.permute.xlu0 %1482
  %v1485 = vsel %vm362, %v1483, 0.0
  %1486 = vadd.xlane.f32.xlu0 %v1485
  %v1487 = vpop.xlane.xlu0 %1486
  %v1488 = vld [vmem:[%s3 + $0xb] sm:$0x1]
  %v1489 = vlaneseq
  %v1490 = vshrl.u32 %v1489, 7
  %v1491 = vsub.s32 0, %v1490
  %v1492 = vrot.slane %v1488, %v1491
  %v1493 = vadd.f32 %v1487, %v1492
  %1495 = vset.pattern.permute.xlu0 0
  %1496 = vperm.xlu0 %1495, %v1493
  %v1497 = vpop.permute.xlu0 %1496
  %1499 = vst [vmem:[%s4] sm:$0xff] %v1497
  // Predicated region
  $region18: #{critic_forward.1} parent=0 // pred_check
    _
  $region19: #{critic_forward.1} parent=0 // pred_check_branch
    %1501 = sbr.rel (0) target = $region21
  $region20: #{critic_forward.1} parent=0 // pred_region
    _
  $region21: #{critic_forward.1} parent=0 // pred_fallthru
    _
  // Predicated region
  $region22: #{critic_forward.1} parent=0 // pred_check
    _
  $region23: #{critic_forward.1} parent=0 // pred_check_branch
    %1503 = sbr.rel (0) target = $region25
  $region24: #{critic_forward.1} parent=0 // pred_region
    _
  $region25: #{critic_forward.1} parent=0 // pred_fallthru
    _

</llo_original>
